<compile_context>
chip_gen: v7x
topology: tpu7x:2x2x1
jax: 0.10.0
libtpu: 0.0.40
codegen_flags: <defaults>
</compile_context>

<pallas_src>
import functools
import math

import jax
import jax.numpy as jnp
from jax.experimental import pallas as pl
from jax.experimental.pallas import tpu as pltpu


# ----------------------------- Pallas kernel ---------------------------------

def _layernorm(v, g, b, eps=1e-5):
    mu = jnp.mean(v, axis=-1, keepdims=True)
    var = jnp.mean((v - mu) ** 2, axis=-1, keepdims=True)
    return (v - mu) * jax.lax.rsqrt(var + eps) * g + b


def block_kernel(x_full_ref, x_tile_ref,
                 ln1g_ref, ln1b_ref,
                 wqkv_ref, bqkv_ref,
                 wo_ref, bo_ref,
                 ln2g_ref, ln2b_ref,
                 w1_ref, b1_ref, w2_ref, b2_ref,
                 out_ref,
                 q_scr, k_scr, v_scr, y_scr,
                 *, n_head):
    T, C = x_full_ref.shape[1], x_full_ref.shape[2]
    TQ = x_tile_ref.shape[1]
    H = n_head
    D = C // H
    scale = 1.0 / math.sqrt(D)
    qi = pl.program_id(1)

    # ---- once per batch element: LN1 + fused QKV projection -> head-major scratch ----
    @pl.when(qi == 0)
    def _():
        xf = x_full_ref[0]                                            # (T, C)
        h1 = _layernorm(xf, ln1g_ref[...], ln1b_ref[...])
        qkv = jnp.dot(h1, wqkv_ref[...],
                      preferred_element_type=jnp.float32) + bqkv_ref[...]   # (T, 3C)
        # split into head-major (H, T, D); scale folded into q here (once, not per logit tile)
        for h in range(H):
            q_scr[h] = qkv[:, h * D:(h + 1) * D] * scale
            k_scr[h] = qkv[:, C + h * D:C + (h + 1) * D]
            v_scr[h] = qkv[:, 2 * C + h * D:2 * C + (h + 1) * D]

    # ---- per query tile: causal attention, all heads batched ----
    q0 = pl.multiple_of(qi * TQ, TQ)
    qh = q_scr[:, pl.ds(q0, TQ), :]                                   # (H, TQ, D)

    row = jax.lax.broadcasted_iota(jnp.int32, (TQ, T), 0) + q0        # global row index
    col = jax.lax.broadcasted_iota(jnp.int32, (TQ, T), 1)
    causal = col <= row                                               # (TQ, T)

    att = jnp.einsum('htd,hsd->hts', qh, k_scr[...],
                     preferred_element_type=jnp.float32)              # (H, TQ, T)
    att = jnp.where(causal[None, :, :], att, -jnp.inf)
    att = att - jnp.max(att, axis=-1, keepdims=True)
    e = jnp.exp(att)
    # EUP approximate reciprocal instead of a VALU divide
    p = e * pl.reciprocal(jnp.sum(e, axis=-1, keepdims=True), approx=True)
    y = jnp.einsum('hts,hsd->htd', p, v_scr[...],
                   preferred_element_type=jnp.float32)                # (H, TQ, D)

    # reassemble heads into a lane-contiguous (TQ, C) slab (no jnp.concatenate)
    for h in range(H):
        y_scr[:, h * D:(h + 1) * D] = y[h]

    # output projection + first residual
    yp = jnp.dot(y_scr[...], wo_ref[...],
                 preferred_element_type=jnp.float32) + bo_ref[...]
    x1 = x_tile_ref[0] + yp

    # LN2 + MLP (Linear -> exact-erf GELU, matching torch nn.GELU default -> Linear) + residual
    h2 = _layernorm(x1, ln2g_ref[...], ln2b_ref[...])
    m = jnp.dot(h2, w1_ref[...], preferred_element_type=jnp.float32) + b1_ref[...]
    m = 0.5 * m * (1.0 + jax.lax.erf(m * (1.0 / math.sqrt(2.0))))
    m = jnp.dot(m, w2_ref[...], preferred_element_type=jnp.float32) + b2_ref[...]

    out_ref[0] = x1 + m


# ------------------------------- wrapper --------------------------------------

def block_forward(x, p, n_head, *, seq_tile=None):
    B, T, C = x.shape
    H = n_head
    D = C // H
    assert C % H == 0

    if seq_tile is None:
        seq_tile = T if T <= 128 else 128
    TQ = seq_tile
    assert T % TQ == 0 and (TQ == T or TQ % 8 == 0)
    nq = T // TQ

    # fuse Q/K/V weights into one (C, 3C) matmul operand (done once, outside the kernel)
    wqkv = jnp.concatenate([p["wq"], p["wk"], p["wv"]], axis=1)       # (C, 3C)
    bqkv = jnp.concatenate([p["bq"], p["bk"], p["bv"]], axis=1)       # (1, 3C)

    def full(shape):
        # whole-array block, same block for every grid step (fetched only once by the pipeline)
        return pl.BlockSpec(shape, lambda b, q: (0,) * len(shape))

    in_specs = [
        pl.BlockSpec((1, T, C), lambda b, q: (b, 0, 0)),    # x, full sequence (for K/V/Q build)
        pl.BlockSpec((1, TQ, C), lambda b, q: (b, q, 0)),   # x, query tile (residual path)
        full(p["ln1g"].shape), full(p["ln1b"].shape),
        full(wqkv.shape), full(bqkv.shape),
        full(p["wo"].shape), full(p["bo"].shape),
        full(p["ln2g"].shape), full(p["ln2b"].shape),
        full(p["w1"].shape), full(p["b1"].shape),
        full(p["w2"].shape), full(p["b2"].shape),
    ]

    grid_spec = pltpu.PrefetchScalarGridSpec(
        num_scalar_prefetch=0,
        grid=(B, nq),
        in_specs=in_specs,
        out_specs=pl.BlockSpec((1, TQ, C), lambda b, q: (b, q, 0)),
        scratch_shapes=[
            pltpu.VMEM((H, T, D), jnp.float32),   # q (pre-scaled), head-major
            pltpu.VMEM((H, T, D), jnp.float32),   # k
            pltpu.VMEM((H, T, D), jnp.float32),   # v
            pltpu.VMEM((TQ, C), jnp.float32),     # reassembled attention output tile
        ],
    )

    return pl.pallas_call(
        functools.partial(block_kernel, n_head=n_head),
        out_shape=jax.ShapeDtypeStruct((B, T, C), jnp.float32),
        grid_spec=grid_spec,
        compiler_params=pltpu.CompilerParams(
            # batch axis shards across TensorCores; seq-tile axis is sequential because
            # the K/V scratch computed at qi==0 is reused by later query tiles.
            dimension_semantics=("parallel", "arbitrary")),
    )(x, x,
      p["ln1g"], p["ln1b"],
      wqkv, bqkv,
      p["wo"], p["bo"],
      p["ln2g"], p["ln2b"],
      p["w1"], p["b1"], p["w2"], p["b2"])


# --------------------------- pure-JAX reference --------------------------------

def reference_block(x, p, n_head):
    def ln(v, g, b):
        mu = v.mean(-1, keepdims=True)
        var = ((v - mu) ** 2).mean(-1, keepdims=True)
        return (v - mu) / jnp.sqrt(var + 1e-5) * g + b

    B, T, C = x.shape
    D = C // n_head
    h = ln(x, p["ln1g"], p["ln1b"])
    q = (h @ p["wq"] + p["bq"]).reshape(B, T, n_head, D).transpose(0, 2, 1, 3)
    k = (h @ p["wk"] + p["bk"]).reshape(B, T, n_head, D).transpose(0, 2, 1, 3)
    v = (h @ p["wv"] + p["bv"]).reshape(B, T, n_head, D).transpose(0, 2, 1, 3)
    att = (q @ k.transpose(0, 1, 3, 2)) * (1.0 / math.sqrt(D))
    mask = jnp.tril(jnp.ones((T, T), bool))
    att = jnp.where(mask, att, -jnp.inf)
    att = jax.nn.softmax(att, axis=-1)
    y = (att @ v).transpose(0, 2, 1, 3).reshape(B, T, C)
    y = y @ p["wo"] + p["bo"]
    x1 = x + y
    h2 = ln(x1, p["ln2g"], p["ln2b"])
    m = h2 @ p["w1"] + p["b1"]
    m = 0.5 * m * (1.0 + jax.lax.erf(m / math.sqrt(2.0)))
    m = m @ p["w2"] + p["b2"]
    return x1 + m


# ---------------------------------- main ---------------------------------------

if __name__ == "__main__":
    B, T, C, H = 2, 8, 32, 4           # batch, seq (= block_size), n_embd, n_head

    key = jax.random.PRNGKey(0)
    ks = jax.random.split(key, 16)
    init = lambda k, shape: (0.02 * jax.random.normal(k, shape)).astype(jnp.float32)

    params = dict(
        ln1g=jnp.ones((1, C), jnp.float32), ln1b=jnp.zeros((1, C), jnp.float32),
        wq=init(ks[0], (C, C)), bq=init(ks[1], (1, C)),
        wk=init(ks[2], (C, C)), bk=init(ks[3], (1, C)),
        wv=init(ks[4], (C, C)), bv=init(ks[5], (1, C)),
        wo=init(ks[6], (C, C)), bo=init(ks[7], (1, C)),
        ln2g=jnp.ones((1, C), jnp.float32), ln2b=jnp.zeros((1, C), jnp.float32),
        w1=init(ks[8], (C, 4 * C)), b1=init(ks[9], (1, 4 * C)),
        w2=init(ks[10], (4 * C, C)), b2=init(ks[11], (1, C)),
    )

    x = jax.random.normal(ks[12], (B, T, C), jnp.float32)

    y = block_forward(x, params, H)
    jax.block_until_ready(y)

    y_ref = reference_block(x, params, H)
    assert y.shape == (B, T, C)
    # tolerance accounts for the EUP approximate-reciprocal softmax normalization
    assert jnp.allclose(y, y_ref, atol=1e-3, rtol=1e-3), "mismatch vs reference"

    print("KERNEL_OK")
</pallas_src>

<mosaic_0001>
module attributes {stable_mosaic.version = 11 : i64} {
  func.func @block_kernel(%arg0: i32, %arg1: i32, %arg2: memref<1x8x32xf32, #tpu.memory_space<vmem>>, %arg3: memref<1x8x32xf32, #tpu.memory_space<vmem>>, %arg4: memref<1x32xf32, #tpu.memory_space<vmem>>, %arg5: memref<1x32xf32, #tpu.memory_space<vmem>>, %arg6: memref<32x96xf32, #tpu.memory_space<vmem>>, %arg7: memref<1x96xf32, #tpu.memory_space<vmem>>, %arg8: memref<32x32xf32, #tpu.memory_space<vmem>>, %arg9: memref<1x32xf32, #tpu.memory_space<vmem>>, %arg10: memref<1x32xf32, #tpu.memory_space<vmem>>, %arg11: memref<1x32xf32, #tpu.memory_space<vmem>>, %arg12: memref<32x128xf32, #tpu.memory_space<vmem>>, %arg13: memref<1x128xf32, #tpu.memory_space<vmem>>, %arg14: memref<128x32xf32, #tpu.memory_space<vmem>>, %arg15: memref<1x32xf32, #tpu.memory_space<vmem>>, %arg16: memref<1x8x32xf32, #tpu.memory_space<vmem>>, %arg17: memref<4x8x8xf32, #tpu.memory_space<vmem>>, %arg18: memref<4x8x8xf32, #tpu.memory_space<vmem>>, %arg19: memref<4x8x8xf32, #tpu.memory_space<vmem>>, %arg20: memref<8x32xf32, #tpu.memory_space<vmem>>) attributes {dimension_semantics = [#tpu.dimension_semantics<parallel>, #tpu.dimension_semantics<arbitrary>], iteration_bounds = array<i64: 2, 1>, scalar_prefetch = 0 : i64, scratch_operands = 4 : i64, tpu.core_type = #tpu.core_type<tc>, window_params = [{transform_indices = @transform_0, window_bounds = array<i64: 1, 8, 32>}, {transform_indices = @transform_1, window_bounds = array<i64: 1, 8, 32>}, {pipeline_mode = #tpu.pipeline_mode<synchronous>, transform_indices = @transform_2, window_bounds = array<i64: 1, 32>}, {pipeline_mode = #tpu.pipeline_mode<synchronous>, transform_indices = @transform_3, window_bounds = array<i64: 1, 32>}, {pipeline_mode = #tpu.pipeline_mode<synchronous>, transform_indices = @transform_4, window_bounds = array<i64: 32, 96>}, {pipeline_mode = #tpu.pipeline_mode<synchronous>, transform_indices = @transform_5, window_bounds = array<i64: 1, 96>}, {pipeline_mode = #tpu.pipeline_mode<synchronous>, transform_indices = @transform_6, window_bounds = array<i64: 32, 32>}, {pipeline_mode = #tpu.pipeline_mode<synchronous>, transform_indices = @transform_7, window_bounds = array<i64: 1, 32>}, {pipeline_mode = #tpu.pipeline_mode<synchronous>, transform_indices = @transform_8, window_bounds = array<i64: 1, 32>}, {pipeline_mode = #tpu.pipeline_mode<synchronous>, transform_indices = @transform_9, window_bounds = array<i64: 1, 32>}, {pipeline_mode = #tpu.pipeline_mode<synchronous>, transform_indices = @transform_10, window_bounds = array<i64: 32, 128>}, {pipeline_mode = #tpu.pipeline_mode<synchronous>, transform_indices = @transform_11, window_bounds = array<i64: 1, 128>}, {pipeline_mode = #tpu.pipeline_mode<synchronous>, transform_indices = @transform_12, window_bounds = array<i64: 128, 32>}, {pipeline_mode = #tpu.pipeline_mode<synchronous>, transform_indices = @transform_13, window_bounds = array<i64: 1, 32>}, {transform_indices = @transform_14, window_bounds = array<i64: 1, 8, 32>}]} {
    %c0_i32 = arith.constant 0 : i32
    %0 = arith.cmpi eq, %arg1, %c0_i32 : i32
    %1 = arith.extui %0 : i1 to i32
    %c0_i32_0 = arith.constant 0 : i32
    %2 = arith.cmpi ne, %1, %c0_i32_0 : i32
    scf.if %2 {
      %c0_52 = arith.constant 0 : index
      %c0_53 = arith.constant 0 : index
      %c0_54 = arith.constant 0 : index
      %98 = vector.load %arg2[%c0_52, %c0_53, %c0_54] : memref<1x8x32xf32, #tpu.memory_space<vmem>>, vector<1x8x32xf32>
      %99 = vector.shape_cast %98 : vector<1x8x32xf32> to vector<8x32xf32>
      %c0_55 = arith.constant 0 : index
      %c0_56 = arith.constant 0 : index
      %100 = vector.load %arg4[%c0_55, %c0_56] : memref<1x32xf32, #tpu.memory_space<vmem>>, vector<1x32xf32>
      %c0_57 = arith.constant 0 : index
      %c0_58 = arith.constant 0 : index
      %101 = vector.load %arg5[%c0_57, %c0_58] : memref<1x32xf32, #tpu.memory_space<vmem>>, vector<1x32xf32>
      %cst_59 = arith.constant dense<0.000000e+00> : vector<8xf32>
      %102 = vector.multi_reduction <add>, %99, %cst_59 [1] : vector<8x32xf32> to vector<8xf32>
      %103 = vector.shape_cast %102 : vector<8xf32> to vector<8x1xf32>
      %cst_60 = arith.constant 3.200000e+01 : f32
      %104 = vector.broadcast %cst_60 : f32 to vector<8x1xf32>
      %105 = arith.divf %103, %104 : vector<8x1xf32>
      %106 = vector.broadcast %105 : vector<8x1xf32> to vector<8x32xf32>
      %107 = arith.subf %99, %106 : vector<8x32xf32>
      %108 = arith.mulf %107, %107 : vector<8x32xf32>
      %cst_61 = arith.constant dense<0.000000e+00> : vector<8xf32>
      %109 = vector.multi_reduction <add>, %108, %cst_61 [1] : vector<8x32xf32> to vector<8xf32>
      %110 = vector.shape_cast %109 : vector<8xf32> to vector<8x1xf32>
      %cst_62 = arith.constant 3.200000e+01 : f32
      %111 = vector.broadcast %cst_62 : f32 to vector<8x1xf32>
      %112 = arith.divf %110, %111 : vector<8x1xf32>
      %113 = vector.broadcast %105 : vector<8x1xf32> to vector<8x32xf32>
      %114 = arith.subf %99, %113 : vector<8x32xf32>
      %cst_63 = arith.constant 9.99999974E-6 : f32
      %115 = vector.broadcast %cst_63 : f32 to vector<8x1xf32>
      %116 = arith.addf %112, %115 : vector<8x1xf32>
      %117 = math.rsqrt %116 : vector<8x1xf32>
      %118 = vector.broadcast %117 : vector<8x1xf32> to vector<8x32xf32>
      %119 = arith.mulf %114, %118 : vector<8x32xf32>
      %120 = vector.broadcast %100 : vector<1x32xf32> to vector<8x32xf32>
      %121 = arith.mulf %119, %120 : vector<8x32xf32>
      %122 = vector.broadcast %101 : vector<1x32xf32> to vector<8x32xf32>
      %123 = arith.addf %121, %122 : vector<8x32xf32>
      %c0_64 = arith.constant 0 : index
      %c0_65 = arith.constant 0 : index
      %124 = vector.load %arg6[%c0_64, %c0_65] : memref<32x96xf32, #tpu.memory_space<vmem>>, vector<32x96xf32>
      %cst_66 = arith.constant dense<0.000000e+00> : vector<8x96xf32>
      %125 = tpu.matmul %123, %124, %cst_66 {dimension_numbers = #tpu.dot_dimension_numbers<[1], [0], [0], [1], [0, 0, 1, 1], [], []>} : vector<8x32xf32>, vector<32x96xf32>, vector<8x96xf32> -> vector<8x96xf32>
      %c0_67 = arith.constant 0 : index
      %c0_68 = arith.constant 0 : index
      %126 = vector.load %arg7[%c0_67, %c0_68] : memref<1x96xf32, #tpu.memory_space<vmem>>, vector<1x96xf32>
      %127 = vector.broadcast %126 : vector<1x96xf32> to vector<8x96xf32>
      %128 = arith.addf %125, %127 : vector<8x96xf32>
      %129 = vector.extract_strided_slice %128 {offsets = [0, 0], sizes = [8, 8], strides = [1, 1]} : vector<8x96xf32> to vector<8x8xf32>
      %cst_69 = arith.constant 0.353553385 : f32
      %130 = vector.broadcast %cst_69 : f32 to vector<8x8xf32>
      %131 = arith.mulf %129, %130 : vector<8x8xf32>
      %c0_70 = arith.constant 0 : index
      %c0_71 = arith.constant 0 : index
      %c0_72 = arith.constant 0 : index
      %132 = vector.load %arg17[%c0_70, %c0_71, %c0_72] : memref<4x8x8xf32, #tpu.memory_space<vmem>>, vector<1x8x8xf32>
      %133 = vector.shape_cast %132 : vector<1x8x8xf32> to vector<8x8xf32>
      %134 = vector.shape_cast %131 : vector<8x8xf32> to vector<1x8x8xf32>
      tpu.vector_store %arg17[%c0_70, %c0_71, %c0_72], %134 {strides = array<i32>} : memref<4x8x8xf32, #tpu.memory_space<vmem>>, vector<1x8x8xf32>,
      %135 = vector.extract_strided_slice %128 {offsets = [0, 32], sizes = [8, 8], strides = [1, 1]} : vector<8x96xf32> to vector<8x8xf32>
      %c0_73 = arith.constant 0 : index
      %c0_74 = arith.constant 0 : index
      %c0_75 = arith.constant 0 : index
      %136 = vector.load %arg18[%c0_73, %c0_74, %c0_75] : memref<4x8x8xf32, #tpu.memory_space<vmem>>, vector<1x8x8xf32>
      %137 = vector.shape_cast %136 : vector<1x8x8xf32> to vector<8x8xf32>
      %138 = vector.shape_cast %135 : vector<8x8xf32> to vector<1x8x8xf32>
      tpu.vector_store %arg18[%c0_73, %c0_74, %c0_75], %138 {strides = array<i32>} : memref<4x8x8xf32, #tpu.memory_space<vmem>>, vector<1x8x8xf32>,
      %139 = vector.extract_strided_slice %128 {offsets = [0, 64], sizes = [8, 8], strides = [1, 1]} : vector<8x96xf32> to vector<8x8xf32>
      %c0_76 = arith.constant 0 : index
      %c0_77 = arith.constant 0 : index
      %c0_78 = arith.constant 0 : index
      %140 = vector.load %arg19[%c0_76, %c0_77, %c0_78] : memref<4x8x8xf32, #tpu.memory_space<vmem>>, vector<1x8x8xf32>
      %141 = vector.shape_cast %140 : vector<1x8x8xf32> to vector<8x8xf32>
      %142 = vector.shape_cast %139 : vector<8x8xf32> to vector<1x8x8xf32>
      tpu.vector_store %arg19[%c0_76, %c0_77, %c0_78], %142 {strides = array<i32>} : memref<4x8x8xf32, #tpu.memory_space<vmem>>, vector<1x8x8xf32>,
      %143 = vector.extract_strided_slice %128 {offsets = [0, 8], sizes = [8, 8], strides = [1, 1]} : vector<8x96xf32> to vector<8x8xf32>
      %cst_79 = arith.constant 0.353553385 : f32
      %144 = vector.broadcast %cst_79 : f32 to vector<8x8xf32>
      %145 = arith.mulf %143, %144 : vector<8x8xf32>
      %c1 = arith.constant 1 : index
      %c0_80 = arith.constant 0 : index
      %c0_81 = arith.constant 0 : index
      %146 = vector.load %arg17[%c1, %c0_80, %c0_81] : memref<4x8x8xf32, #tpu.memory_space<vmem>>, vector<1x8x8xf32>
      %147 = vector.shape_cast %146 : vector<1x8x8xf32> to vector<8x8xf32>
      %148 = vector.shape_cast %145 : vector<8x8xf32> to vector<1x8x8xf32>
      tpu.vector_store %arg17[%c1, %c0_80, %c0_81], %148 {strides = array<i32>} : memref<4x8x8xf32, #tpu.memory_space<vmem>>, vector<1x8x8xf32>,
      %149 = vector.extract_strided_slice %128 {offsets = [0, 40], sizes = [8, 8], strides = [1, 1]} : vector<8x96xf32> to vector<8x8xf32>
      %c1_82 = arith.constant 1 : index
      %c0_83 = arith.constant 0 : index
      %c0_84 = arith.constant 0 : index
      %150 = vector.load %arg18[%c1_82, %c0_83, %c0_84] : memref<4x8x8xf32, #tpu.memory_space<vmem>>, vector<1x8x8xf32>
      %151 = vector.shape_cast %150 : vector<1x8x8xf32> to vector<8x8xf32>
      %152 = vector.shape_cast %149 : vector<8x8xf32> to vector<1x8x8xf32>
      tpu.vector_store %arg18[%c1_82, %c0_83, %c0_84], %152 {strides = array<i32>} : memref<4x8x8xf32, #tpu.memory_space<vmem>>, vector<1x8x8xf32>,
      %153 = vector.extract_strided_slice %128 {offsets = [0, 72], sizes = [8, 8], strides = [1, 1]} : vector<8x96xf32> to vector<8x8xf32>
      %c1_85 = arith.constant 1 : index
      %c0_86 = arith.constant 0 : index
      %c0_87 = arith.constant 0 : index
      %154 = vector.load %arg19[%c1_85, %c0_86, %c0_87] : memref<4x8x8xf32, #tpu.memory_space<vmem>>, vector<1x8x8xf32>
      %155 = vector.shape_cast %154 : vector<1x8x8xf32> to vector<8x8xf32>
      %156 = vector.shape_cast %153 : vector<8x8xf32> to vector<1x8x8xf32>
      tpu.vector_store %arg19[%c1_85, %c0_86, %c0_87], %156 {strides = array<i32>} : memref<4x8x8xf32, #tpu.memory_space<vmem>>, vector<1x8x8xf32>,
      %157 = vector.extract_strided_slice %128 {offsets = [0, 16], sizes = [8, 8], strides = [1, 1]} : vector<8x96xf32> to vector<8x8xf32>
      %cst_88 = arith.constant 0.353553385 : f32
      %158 = vector.broadcast %cst_88 : f32 to vector<8x8xf32>
      %159 = arith.mulf %157, %158 : vector<8x8xf32>
      %c2 = arith.constant 2 : index
      %c0_89 = arith.constant 0 : index
      %c0_90 = arith.constant 0 : index
      %160 = vector.load %arg17[%c2, %c0_89, %c0_90] : memref<4x8x8xf32, #tpu.memory_space<vmem>>, vector<1x8x8xf32>
      %161 = vector.shape_cast %160 : vector<1x8x8xf32> to vector<8x8xf32>
      %162 = vector.shape_cast %159 : vector<8x8xf32> to vector<1x8x8xf32>
      tpu.vector_store %arg17[%c2, %c0_89, %c0_90], %162 {strides = array<i32>} : memref<4x8x8xf32, #tpu.memory_space<vmem>>, vector<1x8x8xf32>,
      %163 = vector.extract_strided_slice %128 {offsets = [0, 48], sizes = [8, 8], strides = [1, 1]} : vector<8x96xf32> to vector<8x8xf32>
      %c2_91 = arith.constant 2 : index
      %c0_92 = arith.constant 0 : index
      %c0_93 = arith.constant 0 : index
      %164 = vector.load %arg18[%c2_91, %c0_92, %c0_93] : memref<4x8x8xf32, #tpu.memory_space<vmem>>, vector<1x8x8xf32>
      %165 = vector.shape_cast %164 : vector<1x8x8xf32> to vector<8x8xf32>
      %166 = vector.shape_cast %163 : vector<8x8xf32> to vector<1x8x8xf32>
      tpu.vector_store %arg18[%c2_91, %c0_92, %c0_93], %166 {strides = array<i32>} : memref<4x8x8xf32, #tpu.memory_space<vmem>>, vector<1x8x8xf32>,
      %167 = vector.extract_strided_slice %128 {offsets = [0, 80], sizes = [8, 8], strides = [1, 1]} : vector<8x96xf32> to vector<8x8xf32>
      %c2_94 = arith.constant 2 : index
      %c0_95 = arith.constant 0 : index
      %c0_96 = arith.constant 0 : index
      %168 = vector.load %arg19[%c2_94, %c0_95, %c0_96] : memref<4x8x8xf32, #tpu.memory_space<vmem>>, vector<1x8x8xf32>
      %169 = vector.shape_cast %168 : vector<1x8x8xf32> to vector<8x8xf32>
      %170 = vector.shape_cast %167 : vector<8x8xf32> to vector<1x8x8xf32>
      tpu.vector_store %arg19[%c2_94, %c0_95, %c0_96], %170 {strides = array<i32>} : memref<4x8x8xf32, #tpu.memory_space<vmem>>, vector<1x8x8xf32>,
      %171 = vector.extract_strided_slice %128 {offsets = [0, 24], sizes = [8, 8], strides = [1, 1]} : vector<8x96xf32> to vector<8x8xf32>
      %cst_97 = arith.constant 0.353553385 : f32
      %172 = vector.broadcast %cst_97 : f32 to vector<8x8xf32>
      %173 = arith.mulf %171, %172 : vector<8x8xf32>
      %c3 = arith.constant 3 : index
      %c0_98 = arith.constant 0 : index
      %c0_99 = arith.constant 0 : index
      %174 = vector.load %arg17[%c3, %c0_98, %c0_99] : memref<4x8x8xf32, #tpu.memory_space<vmem>>, vector<1x8x8xf32>
      %175 = vector.shape_cast %174 : vector<1x8x8xf32> to vector<8x8xf32>
      %176 = vector.shape_cast %173 : vector<8x8xf32> to vector<1x8x8xf32>
      tpu.vector_store %arg17[%c3, %c0_98, %c0_99], %176 {strides = array<i32>} : memref<4x8x8xf32, #tpu.memory_space<vmem>>, vector<1x8x8xf32>,
      %177 = vector.extract_strided_slice %128 {offsets = [0, 56], sizes = [8, 8], strides = [1, 1]} : vector<8x96xf32> to vector<8x8xf32>
      %c3_100 = arith.constant 3 : index
      %c0_101 = arith.constant 0 : index
      %c0_102 = arith.constant 0 : index
      %178 = vector.load %arg18[%c3_100, %c0_101, %c0_102] : memref<4x8x8xf32, #tpu.memory_space<vmem>>, vector<1x8x8xf32>
      %179 = vector.shape_cast %178 : vector<1x8x8xf32> to vector<8x8xf32>
      %180 = vector.shape_cast %177 : vector<8x8xf32> to vector<1x8x8xf32>
      tpu.vector_store %arg18[%c3_100, %c0_101, %c0_102], %180 {strides = array<i32>} : memref<4x8x8xf32, #tpu.memory_space<vmem>>, vector<1x8x8xf32>,
      %181 = vector.extract_strided_slice %128 {offsets = [0, 88], sizes = [8, 8], strides = [1, 1]} : vector<8x96xf32> to vector<8x8xf32>
      %c3_103 = arith.constant 3 : index
      %c0_104 = arith.constant 0 : index
      %c0_105 = arith.constant 0 : index
      %182 = vector.load %arg19[%c3_103, %c0_104, %c0_105] : memref<4x8x8xf32, #tpu.memory_space<vmem>>, vector<1x8x8xf32>
      %183 = vector.shape_cast %182 : vector<1x8x8xf32> to vector<8x8xf32>
      %184 = vector.shape_cast %181 : vector<8x8xf32> to vector<1x8x8xf32>
      tpu.vector_store %arg19[%c3_103, %c0_104, %c0_105], %184 {strides = array<i32>} : memref<4x8x8xf32, #tpu.memory_space<vmem>>, vector<1x8x8xf32>,
    } else {
    }
    %c8_i32 = arith.constant 8 : i32
    %3 = arith.muli %arg1, %c8_i32 : i32
    %4 = tpu.assume_multiple %3, 8 : i32
    %c0 = arith.constant 0 : index
    %5 = arith.index_cast %4 : i32 to index
    %c0_1 = arith.constant 0 : index
    %6 = vector.load %arg17[%c0, %5, %c0_1] : memref<4x8x8xf32, #tpu.memory_space<vmem>>, vector<4x8x8xf32>
    %7 = tpu.iota {dimensions = array<i32: 0>} : vector<8x8xi32>
    %8 = vector.broadcast %4 : i32 to vector<8x8xi32>
    %9 = arith.addi %7, %8 : vector<8x8xi32>
    %10 = tpu.iota {dimensions = array<i32: 1>} : vector<8x8xi32>
    %11 = arith.cmpi sle, %10, %9 : vector<8x8xi32>
    %c0_2 = arith.constant 0 : index
    %c0_3 = arith.constant 0 : index
    %c0_4 = arith.constant 0 : index
    %12 = vector.load %arg18[%c0_2, %c0_3, %c0_4] : memref<4x8x8xf32, #tpu.memory_space<vmem>>, vector<4x8x8xf32>
    "tpu.trace_start"() <{level = 10 : i32, message = "htd,hsd->hts"}> : () -> ()
    %cst = arith.constant dense<0.000000e+00> : vector<4x8x8xf32>
    %13 = tpu.matmul %6, %12, %cst {dimension_numbers = #tpu.dot_dimension_numbers<[2], [2], [1], [1], [0, 0, 0, 1, 1, 1], [0], [0]>} : vector<4x8x8xf32>, vector<4x8x8xf32>, vector<4x8x8xf32> -> vector<4x8x8xf32>
    "tpu.trace_stop"() : () -> ()
    %14 = vector.shape_cast %11 : vector<8x8xi1> to vector<1x8x8xi1>
    %cst_5 = arith.constant 0xFF800000 : f32
    %15 = vector.shape_cast %14 : vector<1x8x8xi1> to vector<1x8x8xi1>
    %16 = vector.broadcast %15 : vector<1x8x8xi1> to vector<4x8x8xi1>
    %17 = vector.broadcast %cst_5 : f32 to vector<4x8x8xf32>
    %18 = arith.select %16, %13, %17 : vector<4x8x8xi1>, vector<4x8x8xf32>
    %cst_6 = arith.constant dense<0xFF800000> : vector<4x8xf32>
    %19 = vector.multi_reduction <maximumf>, %18, %cst_6 [2] : vector<4x8x8xf32> to vector<4x8xf32>
    %20 = vector.shape_cast %19 : vector<4x8xf32> to vector<4x8x1xf32>
    %21 = vector.broadcast %20 : vector<4x8x1xf32> to vector<4x8x8xf32>
    %22 = arith.subf %18, %21 : vector<4x8x8xf32>
    %23 = math.exp %22 : vector<4x8x8xf32>
    %cst_7 = arith.constant dense<0.000000e+00> : vector<4x8xf32>
    %24 = vector.multi_reduction <add>, %23, %cst_7 [2] : vector<4x8x8xf32> to vector<4x8xf32>
    %25 = vector.shape_cast %24 : vector<4x8xf32> to vector<4x8x1xf32>
    %26 = tpu.reciprocal %25 {approx = true} : vector<4x8x1xf32> -> vector<4x8x1xf32>
    %27 = vector.broadcast %26 : vector<4x8x1xf32> to vector<4x8x8xf32>
    %28 = arith.mulf %23, %27 : vector<4x8x8xf32>
    %c0_8 = arith.constant 0 : index
    %c0_9 = arith.constant 0 : index
    %c0_10 = arith.constant 0 : index
    %29 = vector.load %arg19[%c0_8, %c0_9, %c0_10] : memref<4x8x8xf32, #tpu.memory_space<vmem>>, vector<4x8x8xf32>
    "tpu.trace_start"() <{level = 10 : i32, message = "hts,hsd->htd"}> : () -> ()
    %cst_11 = arith.constant dense<0.000000e+00> : vector<4x8x8xf32>
    %30 = tpu.matmul %28, %29, %cst_11 {dimension_numbers = #tpu.dot_dimension_numbers<[2], [1], [1], [2], [0, 0, 0, 1, 1, 2], [0], [0]>} : vector<4x8x8xf32>, vector<4x8x8xf32>, vector<4x8x8xf32> -> vector<4x8x8xf32>
    "tpu.trace_stop"() : () -> ()
    %31 = vector.extract_strided_slice %30 {offsets = [0, 0, 0], sizes = [1, 8, 8], strides = [1, 1, 1]} : vector<4x8x8xf32> to vector<1x8x8xf32>
    %32 = vector.shape_cast %31 : vector<1x8x8xf32> to vector<8x8xf32>
    %c0_12 = arith.constant 0 : index
    %c0_13 = arith.constant 0 : index
    %33 = vector.load %arg20[%c0_12, %c0_13] : memref<8x32xf32, #tpu.memory_space<vmem>>, vector<8x8xf32>
    tpu.vector_store %arg20[%c0_12, %c0_13], %32 {strides = array<i32>} : memref<8x32xf32, #tpu.memory_space<vmem>>, vector<8x8xf32>,
    %34 = vector.extract_strided_slice %30 {offsets = [1, 0, 0], sizes = [1, 8, 8], strides = [1, 1, 1]} : vector<4x8x8xf32> to vector<1x8x8xf32>
    %35 = vector.shape_cast %34 : vector<1x8x8xf32> to vector<8x8xf32>
    %c0_14 = arith.constant 0 : index
    %c8 = arith.constant 8 : index
    %36 = vector.load %arg20[%c0_14, %c8] : memref<8x32xf32, #tpu.memory_space<vmem>>, vector<8x8xf32>
    tpu.vector_store %arg20[%c0_14, %c8], %35 {strides = array<i32>} : memref<8x32xf32, #tpu.memory_space<vmem>>, vector<8x8xf32>,
    %37 = vector.extract_strided_slice %30 {offsets = [2, 0, 0], sizes = [1, 8, 8], strides = [1, 1, 1]} : vector<4x8x8xf32> to vector<1x8x8xf32>
    %38 = vector.shape_cast %37 : vector<1x8x8xf32> to vector<8x8xf32>
    %c0_15 = arith.constant 0 : index
    %c16 = arith.constant 16 : index
    %39 = vector.load %arg20[%c0_15, %c16] : memref<8x32xf32, #tpu.memory_space<vmem>>, vector<8x8xf32>
    tpu.vector_store %arg20[%c0_15, %c16], %38 {strides = array<i32>} : memref<8x32xf32, #tpu.memory_space<vmem>>, vector<8x8xf32>,
    %40 = vector.extract_strided_slice %30 {offsets = [3, 0, 0], sizes = [1, 8, 8], strides = [1, 1, 1]} : vector<4x8x8xf32> to vector<1x8x8xf32>
    %41 = vector.shape_cast %40 : vector<1x8x8xf32> to vector<8x8xf32>
    %c0_16 = arith.constant 0 : index
    %c24 = arith.constant 24 : index
    %42 = vector.load %arg20[%c0_16, %c24] : memref<8x32xf32, #tpu.memory_space<vmem>>, vector<8x8xf32>
    tpu.vector_store %arg20[%c0_16, %c24], %41 {strides = array<i32>} : memref<8x32xf32, #tpu.memory_space<vmem>>, vector<8x8xf32>,
    %c0_17 = arith.constant 0 : index
    %c0_18 = arith.constant 0 : index
    %43 = vector.load %arg20[%c0_17, %c0_18] : memref<8x32xf32, #tpu.memory_space<vmem>>, vector<8x32xf32>
    %c0_19 = arith.constant 0 : index
    %c0_20 = arith.constant 0 : index
    %44 = vector.load %arg8[%c0_19, %c0_20] : memref<32x32xf32, #tpu.memory_space<vmem>>, vector<32x32xf32>
    %cst_21 = arith.constant dense<0.000000e+00> : vector<8x32xf32>
    %45 = tpu.matmul %43, %44, %cst_21 {dimension_numbers = #tpu.dot_dimension_numbers<[1], [0], [0], [1], [0, 0, 1, 1], [], []>} : vector<8x32xf32>, vector<32x32xf32>, vector<8x32xf32> -> vector<8x32xf32>
    %c0_22 = arith.constant 0 : index
    %c0_23 = arith.constant 0 : index
    %46 = vector.load %arg9[%c0_22, %c0_23] : memref<1x32xf32, #tpu.memory_space<vmem>>, vector<1x32xf32>
    %47 = vector.broadcast %46 : vector<1x32xf32> to vector<8x32xf32>
    %48 = arith.addf %45, %47 : vector<8x32xf32>
    %c0_24 = arith.constant 0 : index
    %c0_25 = arith.constant 0 : index
    %c0_26 = arith.constant 0 : index
    %49 = vector.load %arg3[%c0_24, %c0_25, %c0_26] : memref<1x8x32xf32, #tpu.memory_space<vmem>>, vector<1x8x32xf32>
    %50 = vector.shape_cast %49 : vector<1x8x32xf32> to vector<8x32xf32>
    %51 = arith.addf %50, %48 : vector<8x32xf32>
    %c0_27 = arith.constant 0 : index
    %c0_28 = arith.constant 0 : index
    %52 = vector.load %arg10[%c0_27, %c0_28] : memref<1x32xf32, #tpu.memory_space<vmem>>, vector<1x32xf32>
    %c0_29 = arith.constant 0 : index
    %c0_30 = arith.constant 0 : index
    %53 = vector.load %arg11[%c0_29, %c0_30] : memref<1x32xf32, #tpu.memory_space<vmem>>, vector<1x32xf32>
    %cst_31 = arith.constant dense<0.000000e+00> : vector<8xf32>
    %54 = vector.multi_reduction <add>, %51, %cst_31 [1] : vector<8x32xf32> to vector<8xf32>
    %55 = vector.shape_cast %54 : vector<8xf32> to vector<8x1xf32>
    %cst_32 = arith.constant 3.200000e+01 : f32
    %56 = vector.broadcast %cst_32 : f32 to vector<8x1xf32>
    %57 = arith.divf %55, %56 : vector<8x1xf32>
    %58 = vector.broadcast %57 : vector<8x1xf32> to vector<8x32xf32>
    %59 = arith.subf %51, %58 : vector<8x32xf32>
    %60 = arith.mulf %59, %59 : vector<8x32xf32>
    %cst_33 = arith.constant dense<0.000000e+00> : vector<8xf32>
    %61 = vector.multi_reduction <add>, %60, %cst_33 [1] : vector<8x32xf32> to vector<8xf32>
    %62 = vector.shape_cast %61 : vector<8xf32> to vector<8x1xf32>
    %cst_34 = arith.constant 3.200000e+01 : f32
    %63 = vector.broadcast %cst_34 : f32 to vector<8x1xf32>
    %64 = arith.divf %62, %63 : vector<8x1xf32>
    %65 = vector.broadcast %57 : vector<8x1xf32> to vector<8x32xf32>
    %66 = arith.subf %51, %65 : vector<8x32xf32>
    %cst_35 = arith.constant 9.99999974E-6 : f32
    %67 = vector.broadcast %cst_35 : f32 to vector<8x1xf32>
    %68 = arith.addf %64, %67 : vector<8x1xf32>
    %69 = math.rsqrt %68 : vector<8x1xf32>
    %70 = vector.broadcast %69 : vector<8x1xf32> to vector<8x32xf32>
    %71 = arith.mulf %66, %70 : vector<8x32xf32>
    %72 = vector.broadcast %52 : vector<1x32xf32> to vector<8x32xf32>
    %73 = arith.mulf %71, %72 : vector<8x32xf32>
    %74 = vector.broadcast %53 : vector<1x32xf32> to vector<8x32xf32>
    %75 = arith.addf %73, %74 : vector<8x32xf32>
    %c0_36 = arith.constant 0 : index
    %c0_37 = arith.constant 0 : index
    %76 = vector.load %arg12[%c0_36, %c0_37] : memref<32x128xf32, #tpu.memory_space<vmem>>, vector<32x128xf32>
    %cst_38 = arith.constant dense<0.000000e+00> : vector<8x128xf32>
    %77 = tpu.matmul %75, %76, %cst_38 {dimension_numbers = #tpu.dot_dimension_numbers<[1], [0], [0], [1], [0, 0, 1, 1], [], []>} : vector<8x32xf32>, vector<32x128xf32>, vector<8x128xf32> -> vector<8x128xf32>
    %c0_39 = arith.constant 0 : index
    %c0_40 = arith.constant 0 : index
    %78 = vector.load %arg13[%c0_39, %c0_40] : memref<1x128xf32, #tpu.memory_space<vmem>>, vector<1x128xf32>
    %79 = vector.broadcast %78 : vector<1x128xf32> to vector<8x128xf32>
    %80 = arith.addf %77, %79 : vector<8x128xf32>
    %cst_41 = arith.constant 5.000000e-01 : f32
    %81 = vector.broadcast %cst_41 : f32 to vector<8x128xf32>
    %82 = arith.mulf %81, %80 : vector<8x128xf32>
    %cst_42 = arith.constant 0.707106769 : f32
    %83 = vector.broadcast %cst_42 : f32 to vector<8x128xf32>
    %84 = arith.mulf %80, %83 : vector<8x128xf32>
    %85 = math.erf %84 : vector<8x128xf32>
    %cst_43 = arith.constant 1.000000e+00 : f32
    %86 = vector.broadcast %cst_43 : f32 to vector<8x128xf32>
    %87 = arith.addf %86, %85 : vector<8x128xf32>
    %88 = arith.mulf %82, %87 : vector<8x128xf32>
    %c0_44 = arith.constant 0 : index
    %c0_45 = arith.constant 0 : index
    %89 = vector.load %arg14[%c0_44, %c0_45] : memref<128x32xf32, #tpu.memory_space<vmem>>, vector<128x32xf32>
    %cst_46 = arith.constant dense<0.000000e+00> : vector<8x32xf32>
    %90 = tpu.matmul %88, %89, %cst_46 {dimension_numbers = #tpu.dot_dimension_numbers<[1], [0], [0], [1], [0, 0, 1, 1], [], []>} : vector<8x128xf32>, vector<128x32xf32>, vector<8x32xf32> -> vector<8x32xf32>
    %c0_47 = arith.constant 0 : index
    %c0_48 = arith.constant 0 : index
    %91 = vector.load %arg15[%c0_47, %c0_48] : memref<1x32xf32, #tpu.memory_space<vmem>>, vector<1x32xf32>
    %92 = vector.broadcast %91 : vector<1x32xf32> to vector<8x32xf32>
    %93 = arith.addf %90, %92 : vector<8x32xf32>
    %94 = arith.addf %51, %93 : vector<8x32xf32>
    %c0_49 = arith.constant 0 : index
    %c0_50 = arith.constant 0 : index
    %c0_51 = arith.constant 0 : index
    %95 = vector.load %arg16[%c0_49, %c0_50, %c0_51] : memref<1x8x32xf32, #tpu.memory_space<vmem>>, vector<1x8x32xf32>
    %96 = vector.shape_cast %95 : vector<1x8x32xf32> to vector<8x32xf32>
    %97 = vector.shape_cast %94 : vector<8x32xf32> to vector<1x8x32xf32>
    tpu.vector_store %arg16[%c0_49, %c0_50, %c0_51], %97 {strides = array<i32>} : memref<1x8x32xf32, #tpu.memory_space<vmem>>, vector<1x8x32xf32>,
    return
  }
  func.func @transform_0(%arg0: i32, %arg1: i32) -> (i32, i32, i32) {
    %c0_i32 = arith.constant 0 : i32
    %c0_i32_0 = arith.constant 0 : i32
    %c0_i32_1 = arith.constant 0 : i32
    return %arg0, %c0_i32, %c0_i32_0 : i32, i32, i32
  }
  func.func @transform_1(%arg0: i32, %arg1: i32) -> (i32, i32, i32) {
    %c0_i32 = arith.constant 0 : i32
    %c0_i32_0 = arith.constant 0 : i32
    return %arg0, %arg1, %c0_i32 : i32, i32, i32
  }
  func.func @transform_2(%arg0: i32, %arg1: i32) -> (i32, i32) {
    %c0_i32 = arith.constant 0 : i32
    %c0_i32_0 = arith.constant 0 : i32
    %c0_i32_1 = arith.constant 0 : i32
    return %c0_i32, %c0_i32_0 : i32, i32
  }
  func.func @transform_3(%arg0: i32, %arg1: i32) -> (i32, i32) {
    %c0_i32 = arith.constant 0 : i32
    %c0_i32_0 = arith.constant 0 : i32
    %c0_i32_1 = arith.constant 0 : i32
    return %c0_i32, %c0_i32_0 : i32, i32
  }
  func.func @transform_4(%arg0: i32, %arg1: i32) -> (i32, i32) {
    %c0_i32 = arith.constant 0 : i32
    %c0_i32_0 = arith.constant 0 : i32
    %c0_i32_1 = arith.constant 0 : i32
    return %c0_i32, %c0_i32_0 : i32, i32
  }
  func.func @transform_5(%arg0: i32, %arg1: i32) -> (i32, i32) {
    %c0_i32 = arith.constant 0 : i32
    %c0_i32_0 = arith.constant 0 : i32
    %c0_i32_1 = arith.constant 0 : i32
    return %c0_i32, %c0_i32_0 : i32, i32
  }
  func.func @transform_6(%arg0: i32, %arg1: i32) -> (i32, i32) {
    %c0_i32 = arith.constant 0 : i32
    %c0_i32_0 = arith.constant 0 : i32
    %c0_i32_1 = arith.constant 0 : i32
    return %c0_i32, %c0_i32_0 : i32, i32
  }
  func.func @transform_7(%arg0: i32, %arg1: i32) -> (i32, i32) {
    %c0_i32 = arith.constant 0 : i32
    %c0_i32_0 = arith.constant 0 : i32
    %c0_i32_1 = arith.constant 0 : i32
    return %c0_i32, %c0_i32_0 : i32, i32
  }
  func.func @transform_8(%arg0: i32, %arg1: i32) -> (i32, i32) {
    %c0_i32 = arith.constant 0 : i32
    %c0_i32_0 = arith.constant 0 : i32
    %c0_i32_1 = arith.constant 0 : i32
    return %c0_i32, %c0_i32_0 : i32, i32
  }
  func.func @transform_9(%arg0: i32, %arg1: i32) -> (i32, i32) {
    %c0_i32 = arith.constant 0 : i32
    %c0_i32_0 = arith.constant 0 : i32
    %c0_i32_1 = arith.constant 0 : i32
    return %c0_i32, %c0_i32_0 : i32, i32
  }
  func.func @transform_10(%arg0: i32, %arg1: i32) -> (i32, i32) {
    %c0_i32 = arith.constant 0 : i32
    %c0_i32_0 = arith.constant 0 : i32
    %c0_i32_1 = arith.constant 0 : i32
    return %c0_i32, %c0_i32_0 : i32, i32
  }
  func.func @transform_11(%arg0: i32, %arg1: i32) -> (i32, i32) {
    %c0_i32 = arith.constant 0 : i32
    %c0_i32_0 = arith.constant 0 : i32
    %c0_i32_1 = arith.constant 0 : i32
    return %c0_i32, %c0_i32_0 : i32, i32
  }
  func.func @transform_12(%arg0: i32, %arg1: i32) -> (i32, i32) {
    %c0_i32 = arith.constant 0 : i32
    %c0_i32_0 = arith.constant 0 : i32
    %c0_i32_1 = arith.constant 0 : i32
    return %c0_i32, %c0_i32_0 : i32, i32
  }
  func.func @transform_13(%arg0: i32, %arg1: i32) -> (i32, i32) {
    %c0_i32 = arith.constant 0 : i32
    %c0_i32_0 = arith.constant 0 : i32
    %c0_i32_1 = arith.constant 0 : i32
    return %c0_i32, %c0_i32_0 : i32, i32
  }
  func.func @transform_14(%arg0: i32, %arg1: i32) -> (i32, i32, i32) {
    %c0_i32 = arith.constant 0 : i32
    %c0_i32_0 = arith.constant 0 : i32
    return %arg0, %arg1, %c0_i32 : i32, i32, i32
  }
}

</mosaic_0001>

<llo_original>
// kernel: tpu_custom_call.1
$region0: #{tpu_custom_call.1}
  #allocation0 [shape = 'u32[]', space=smem, size = 0x4, offset = 0x4, fixed_abs, tag = 'smem constant byte address 0x4 - core index']
  #allocation1 [shape = 'u32[144,128]{1,0:T(1,128)}', space=vmem, size = 0x12000, scoped, tag = 'internal scratch']
  #allocation2 [shape = 'f32[4,8,8]{2,1,0:T(8,128)}', space=vmem, size = 0x4000, scoped, tag = 'scratch operand']
  #allocation3 [shape = 'f32[4,8,8]{2,1,0:T(8,128)}', space=vmem, size = 0x4000, scoped, tag = 'scratch operand']
  #allocation4 [shape = 'f32[4,8,8]{2,1,0:T(8,128)}', space=vmem, size = 0x4000, scoped, tag = 'scratch operand']
  #allocation5 [shape = 'f32[8,32]{1,0:T(8,128)}', space=vmem, size = 0x1000, scoped, tag = 'scratch operand']
  %s0 = inlined_call_operand.vmem [shape: f32[2,8,32], index: 0, kind: input, shape index: {}]
  %s1 = inlined_call_operand.vmem [shape: f32[2,8,32], index: 1, kind: input, shape index: {}]
  %s2 = inlined_call_operand.vmem [shape: f32[1,32], index: 2, kind: input, shape index: {}]
  %s3 = inlined_call_operand.vmem [shape: f32[1,32], index: 3, kind: input, shape index: {}]
  %s4 = inlined_call_operand.vmem [shape: f32[32,96], index: 4, kind: input, shape index: {}]
  %s5 = inlined_call_operand.vmem [shape: f32[1,96], index: 5, kind: input, shape index: {}]
  %s6 = inlined_call_operand.vmem [shape: f32[32,32], index: 6, kind: input, shape index: {}]
  %s7 = inlined_call_operand.vmem [shape: f32[1,32], index: 7, kind: input, shape index: {}]
  %s8 = inlined_call_operand.vmem [shape: f32[1,32], index: 8, kind: input, shape index: {}]
  %s9 = inlined_call_operand.vmem [shape: f32[1,32], index: 9, kind: input, shape index: {}]
  %s10 = inlined_call_operand.vmem [shape: f32[32,128], index: 10, kind: input, shape index: {}]
  %s11 = inlined_call_operand.vmem [shape: f32[1,128], index: 11, kind: input, shape index: {}]
  %s12 = inlined_call_operand.vmem [shape: f32[128,32], index: 12, kind: input, shape index: {}]
  %s13 = inlined_call_operand.vmem [shape: f32[1,32], index: 13, kind: input, shape index: {}]
  %s14 = inlined_call_operand.hbm [shape: f32[2,8,32], index: 14, kind: output, shape index: {}]
  %s15 = sld [smem:[#allocation0]]
  $region93: #{tpu_custom_call.1} parent=0
    _
  %s17 = ssub.s32 1, %s15
  %s18 = scalar_select 0, %s17, %s15
  $region1: #{tpu_custom_call.1} parent=0
    #allocation6 [shape = 'u8[8192]{0}', space=vmem, size = 0x2000, scoped, tag = 'output window, operand 0']
    #allocation7 [shape = 's32[2]{0}', space=sflag, size = 0x8, scoped, tag = 'scoped memory for tpu_custom_call.1']
    %19 = vsyncpa [#allocation7], 0
    %s20 = scalar_lea.sflag [#allocation7], 1
    %21 = vsyncpa %s20, 0
    loop: start=0, step=1, limit=4
    $region2: #{tpu_custom_call.1} parent=1 // loop_pre_header
      _
    $region3: #{tpu_custom_call.1} parent=1 // loop_header
      %s23 = sphi 0, %s27
      %p24 = scmp.ge.s32.totalorder %s23, 4
      %s30 = sphi 0, %s42
      %s31 = sphi 0, %s38
      %s32 = sphi 0, %s30
      %s33 = sphi 0, %s31
      %s34 = sphi 0, %s32
      %s35 = sphi 0, %s33
      %s45 = sphi 0, %s47
      %s48 = sphi 0, %s45
      %s49 = sphi 0, %s48
      %s65 = sphi 0, %s49
      %s73 = sphi 0, %s75
      %s76 = sphi 0, %s73
      %s77 = sphi 0, %s76
      %s93 = sphi 0, %s77
      %s97 = sphi 0, %s97
      %s99 = sphi 0, %s97
      %s100 = sphi 0, %s99
      %s114 = sphi 0, %s100
      %s118 = sphi 0, %s118
      %s120 = sphi 0, %s118
      %s121 = sphi 0, %s120
      %s135 = sphi 0, %s121
      %s139 = sphi 0, %s139
      %s141 = sphi 0, %s139
      %s142 = sphi 0, %s141
      %s156 = sphi 0, %s142
      %s160 = sphi 0, %s160
      %s162 = sphi 0, %s160
      %s163 = sphi 0, %s162
      %s177 = sphi 0, %s163
      %s181 = sphi 0, %s181
      %s183 = sphi 0, %s181
      %s184 = sphi 0, %s183
      %s198 = sphi 0, %s184
      %s202 = sphi 0, %s202
      %s204 = sphi 0, %s202
      %s205 = sphi 0, %s204
      %s219 = sphi 0, %s205
      %s223 = sphi 0, %s223
      %s225 = sphi 0, %s223
      %s226 = sphi 0, %s225
      %s240 = sphi 0, %s226
      %s244 = sphi 0, %s244
      %s246 = sphi 0, %s244
      %s247 = sphi 0, %s246
      %s261 = sphi 0, %s247
      %s265 = sphi 0, %s265
      %s267 = sphi 0, %s265
      %s268 = sphi 0, %s267
      %s282 = sphi 0, %s268
      %s286 = sphi 0, %s286
      %s288 = sphi 0, %s286
      %s289 = sphi 0, %s288
      %s303 = sphi 0, %s289
      %s307 = sphi 0, %s307
      %s309 = sphi 0, %s307
      %s310 = sphi 0, %s309
      %s324 = sphi 0, %s310
      %s328 = sphi 0, %s328
      %s330 = sphi 0, %s328
      %s331 = sphi 0, %s330
      %s345 = sphi 0, %s331
      %s353 = sphi 0, %s355
      %s356 = sphi 0, %s353
      %s357 = sphi 0, %s356
      %s373 = sphi 0, %s357
    $region4: #{tpu_custom_call.1} parent=1 // loop_header_branch
      %26 = sbr.rel (%p24) target = $region8
    $region5: #{tpu_custom_call.1} parent=1 // loop_body
      %s28 = ssub.s32 %s23, 1
      %s29 = ssub.s32 %s23, 2
      %s36 = sadd.s32 1, %s31
      %p37 = scmp.ge.s32.totalorder %s36, 1
      %s38 = scalar_select %p37, 0, %s36
      %s39 = sadd.s32 1, %s30
      %s40 = scalar_select %p37, %s39, %s30
      %p41 = scmp.ge.s32.totalorder %s40, 2
      %s42 = scalar_select %p41, 0, %s40
      %s43 = ssub.s32 %s30, %s42
      %p44 = scmp.eq.s32.totalorder %s43, 0
      %s46 = sadd.s32 %s45, 1
      %s47 = scalar_select %p44, %s45, %s46
      %p50 = pneg %p44
      %p51 = scmp.eq.s32.totalorder %s23, 1
      %p52 = por %p50, %p51
      %p53 = scmp.ne.s32.totalorder %s45, %s48
      %p54 = scmp.eq.s32.totalorder %s23, 0
      %p55 = por %p53, %p54
      %p56 = scmp.ne.s32.totalorder %s45, %s48
      %p57 = scmp.eq.s32.totalorder %s28, 1
      %p58 = por %p56, %p57
      %p59 = scmp.ne.s32.totalorder %s48, %s49
      %p60 = scmp.eq.s32.totalorder %s28, 0
      %p61 = por %p59, %p60
      %p62 = scmp.ne.s32.totalorder %s48, %s49
      %p63 = scmp.eq.s32.totalorder %s29, 1
      %p64 = por %p62, %p63
      %p66 = scmp.ne.s32.totalorder %s49, %s65
      %p67 = scmp.eq.s32.totalorder %s29, 0
      %p68 = por %p66, %p67
      %s69 = ssub.s32 %s30, %s42
      %s70 = ssub.s32 %s31, %s38
      %s71 = sor.u32 %s69, %s70
      %p72 = scmp.eq.s32.totalorder %s71, 0
      %s74 = sadd.s32 %s73, 1
      %s75 = scalar_select %p72, %s73, %s74
      %p78 = pneg %p72
      %p79 = scmp.eq.s32.totalorder %s23, 1
      %p80 = por %p78, %p79
      %p81 = scmp.ne.s32.totalorder %s73, %s76
      %p82 = scmp.eq.s32.totalorder %s23, 0
      %p83 = por %p81, %p82
      %p84 = scmp.ne.s32.totalorder %s73, %s76
      %p85 = scmp.eq.s32.totalorder %s28, 1
      %p86 = por %p84, %p85
      %p87 = scmp.ne.s32.totalorder %s76, %s77
      %p88 = scmp.eq.s32.totalorder %s28, 0
      %p89 = por %p87, %p88
      %p90 = scmp.ne.s32.totalorder %s76, %s77
      %p91 = scmp.eq.s32.totalorder %s29, 1
      %p92 = por %p90, %p91
      %p94 = scmp.ne.s32.totalorder %s77, %s93
      %p95 = scmp.eq.s32.totalorder %s29, 0
      %p96 = por %p94, %p95
      %s98 = sadd.s32 %s97, 1
      %p101 = scmp.eq.s32.totalorder %s23, 1
      %p102 = scmp.ne.s32.totalorder %s97, %s99
      %p103 = scmp.eq.s32.totalorder %s23, 0
      %p104 = por %p102, %p103
      %p105 = scmp.ne.s32.totalorder %s97, %s99
      %p106 = scmp.eq.s32.totalorder %s28, 1
      %p107 = por %p105, %p106
      %p108 = scmp.ne.s32.totalorder %s99, %s100
      %p109 = scmp.eq.s32.totalorder %s28, 0
      %p110 = por %p108, %p109
      %p111 = scmp.ne.s32.totalorder %s99, %s100
      %p112 = scmp.eq.s32.totalorder %s29, 1
      %p113 = por %p111, %p112
      %p115 = scmp.ne.s32.totalorder %s100, %s114
      %p116 = scmp.eq.s32.totalorder %s29, 0
      %p117 = por %p115, %p116
      %s119 = sadd.s32 %s118, 1
      %p122 = scmp.eq.s32.totalorder %s23, 1
      %p123 = scmp.ne.s32.totalorder %s118, %s120
      %p124 = scmp.eq.s32.totalorder %s23, 0
      %p125 = por %p123, %p124
      %p126 = scmp.ne.s32.totalorder %s118, %s120
      %p127 = scmp.eq.s32.totalorder %s28, 1
      %p128 = por %p126, %p127
      %p129 = scmp.ne.s32.totalorder %s120, %s121
      %p130 = scmp.eq.s32.totalorder %s28, 0
      %p131 = por %p129, %p130
      %p132 = scmp.ne.s32.totalorder %s120, %s121
      %p133 = scmp.eq.s32.totalorder %s29, 1
      %p134 = por %p132, %p133
      %p136 = scmp.ne.s32.totalorder %s121, %s135
      %p137 = scmp.eq.s32.totalorder %s29, 0
      %p138 = por %p136, %p137
      %s140 = sadd.s32 %s139, 1
      %p143 = scmp.eq.s32.totalorder %s23, 1
      %p144 = scmp.ne.s32.totalorder %s139, %s141
      %p145 = scmp.eq.s32.totalorder %s23, 0
      %p146 = por %p144, %p145
      %p147 = scmp.ne.s32.totalorder %s139, %s141
      %p148 = scmp.eq.s32.totalorder %s28, 1
      %p149 = por %p147, %p148
      %p150 = scmp.ne.s32.totalorder %s141, %s142
      %p151 = scmp.eq.s32.totalorder %s28, 0
      %p152 = por %p150, %p151
      %p153 = scmp.ne.s32.totalorder %s141, %s142
      %p154 = scmp.eq.s32.totalorder %s29, 1
      %p155 = por %p153, %p154
      %p157 = scmp.ne.s32.totalorder %s142, %s156
      %p158 = scmp.eq.s32.totalorder %s29, 0
      %p159 = por %p157, %p158
      %s161 = sadd.s32 %s160, 1
      %p164 = scmp.eq.s32.totalorder %s23, 1
      %p165 = scmp.ne.s32.totalorder %s160, %s162
      %p166 = scmp.eq.s32.totalorder %s23, 0
      %p167 = por %p165, %p166
      %p168 = scmp.ne.s32.totalorder %s160, %s162
      %p169 = scmp.eq.s32.totalorder %s28, 1
      %p170 = por %p168, %p169
      %p171 = scmp.ne.s32.totalorder %s162, %s163
      %p172 = scmp.eq.s32.totalorder %s28, 0
      %p173 = por %p171, %p172
      %p174 = scmp.ne.s32.totalorder %s162, %s163
      %p175 = scmp.eq.s32.totalorder %s29, 1
      %p176 = por %p174, %p175
      %p178 = scmp.ne.s32.totalorder %s163, %s177
      %p179 = scmp.eq.s32.totalorder %s29, 0
      %p180 = por %p178, %p179
      %s182 = sadd.s32 %s181, 1
      %p185 = scmp.eq.s32.totalorder %s23, 1
      %p186 = scmp.ne.s32.totalorder %s181, %s183
      %p187 = scmp.eq.s32.totalorder %s23, 0
      %p188 = por %p186, %p187
      %p189 = scmp.ne.s32.totalorder %s181, %s183
      %p190 = scmp.eq.s32.totalorder %s28, 1
      %p191 = por %p189, %p190
      %p192 = scmp.ne.s32.totalorder %s183, %s184
      %p193 = scmp.eq.s32.totalorder %s28, 0
      %p194 = por %p192, %p193
      %p195 = scmp.ne.s32.totalorder %s183, %s184
      %p196 = scmp.eq.s32.totalorder %s29, 1
      %p197 = por %p195, %p196
      %p199 = scmp.ne.s32.totalorder %s184, %s198
      %p200 = scmp.eq.s32.totalorder %s29, 0
      %p201 = por %p199, %p200
      %s203 = sadd.s32 %s202, 1
      %p206 = scmp.eq.s32.totalorder %s23, 1
      %p207 = scmp.ne.s32.totalorder %s202, %s204
      %p208 = scmp.eq.s32.totalorder %s23, 0
      %p209 = por %p207, %p208
      %p210 = scmp.ne.s32.totalorder %s202, %s204
      %p211 = scmp.eq.s32.totalorder %s28, 1
      %p212 = por %p210, %p211
      %p213 = scmp.ne.s32.totalorder %s204, %s205
      %p214 = scmp.eq.s32.totalorder %s28, 0
      %p215 = por %p213, %p214
      %p216 = scmp.ne.s32.totalorder %s204, %s205
      %p217 = scmp.eq.s32.totalorder %s29, 1
      %p218 = por %p216, %p217
      %p220 = scmp.ne.s32.totalorder %s205, %s219
      %p221 = scmp.eq.s32.totalorder %s29, 0
      %p222 = por %p220, %p221
      %s224 = sadd.s32 %s223, 1
      %p227 = scmp.eq.s32.totalorder %s23, 1
      %p228 = scmp.ne.s32.totalorder %s223, %s225
      %p229 = scmp.eq.s32.totalorder %s23, 0
      %p230 = por %p228, %p229
      %p231 = scmp.ne.s32.totalorder %s223, %s225
      %p232 = scmp.eq.s32.totalorder %s28, 1
      %p233 = por %p231, %p232
      %p234 = scmp.ne.s32.totalorder %s225, %s226
      %p235 = scmp.eq.s32.totalorder %s28, 0
      %p236 = por %p234, %p235
      %p237 = scmp.ne.s32.totalorder %s225, %s226
      %p238 = scmp.eq.s32.totalorder %s29, 1
      %p239 = por %p237, %p238
      %p241 = scmp.ne.s32.totalorder %s226, %s240
      %p242 = scmp.eq.s32.totalorder %s29, 0
      %p243 = por %p241, %p242
      %s245 = sadd.s32 %s244, 1
      %p248 = scmp.eq.s32.totalorder %s23, 1
      %p249 = scmp.ne.s32.totalorder %s244, %s246
      %p250 = scmp.eq.s32.totalorder %s23, 0
      %p251 = por %p249, %p250
      %p252 = scmp.ne.s32.totalorder %s244, %s246
      %p253 = scmp.eq.s32.totalorder %s28, 1
      %p254 = por %p252, %p253
      %p255 = scmp.ne.s32.totalorder %s246, %s247
      %p256 = scmp.eq.s32.totalorder %s28, 0
      %p257 = por %p255, %p256
      %p258 = scmp.ne.s32.totalorder %s246, %s247
      %p259 = scmp.eq.s32.totalorder %s29, 1
      %p260 = por %p258, %p259
      %p262 = scmp.ne.s32.totalorder %s247, %s261
      %p263 = scmp.eq.s32.totalorder %s29, 0
      %p264 = por %p262, %p263
      %s266 = sadd.s32 %s265, 1
      %p269 = scmp.eq.s32.totalorder %s23, 1
      %p270 = scmp.ne.s32.totalorder %s265, %s267
      %p271 = scmp.eq.s32.totalorder %s23, 0
      %p272 = por %p270, %p271
      %p273 = scmp.ne.s32.totalorder %s265, %s267
      %p274 = scmp.eq.s32.totalorder %s28, 1
      %p275 = por %p273, %p274
      %p276 = scmp.ne.s32.totalorder %s267, %s268
      %p277 = scmp.eq.s32.totalorder %s28, 0
      %p278 = por %p276, %p277
      %p279 = scmp.ne.s32.totalorder %s267, %s268
      %p280 = scmp.eq.s32.totalorder %s29, 1
      %p281 = por %p279, %p280
      %p283 = scmp.ne.s32.totalorder %s268, %s282
      %p284 = scmp.eq.s32.totalorder %s29, 0
      %p285 = por %p283, %p284
      %s287 = sadd.s32 %s286, 1
      %p290 = scmp.eq.s32.totalorder %s23, 1
      %p291 = scmp.ne.s32.totalorder %s286, %s288
      %p292 = scmp.eq.s32.totalorder %s23, 0
      %p293 = por %p291, %p292
      %p294 = scmp.ne.s32.totalorder %s286, %s288
      %p295 = scmp.eq.s32.totalorder %s28, 1
      %p296 = por %p294, %p295
      %p297 = scmp.ne.s32.totalorder %s288, %s289
      %p298 = scmp.eq.s32.totalorder %s28, 0
      %p299 = por %p297, %p298
      %p300 = scmp.ne.s32.totalorder %s288, %s289
      %p301 = scmp.eq.s32.totalorder %s29, 1
      %p302 = por %p300, %p301
      %p304 = scmp.ne.s32.totalorder %s289, %s303
      %p305 = scmp.eq.s32.totalorder %s29, 0
      %p306 = por %p304, %p305
      %s308 = sadd.s32 %s307, 1
      %p311 = scmp.eq.s32.totalorder %s23, 1
      %p312 = scmp.ne.s32.totalorder %s307, %s309
      %p313 = scmp.eq.s32.totalorder %s23, 0
      %p314 = por %p312, %p313
      %p315 = scmp.ne.s32.totalorder %s307, %s309
      %p316 = scmp.eq.s32.totalorder %s28, 1
      %p317 = por %p315, %p316
      %p318 = scmp.ne.s32.totalorder %s309, %s310
      %p319 = scmp.eq.s32.totalorder %s28, 0
      %p320 = por %p318, %p319
      %p321 = scmp.ne.s32.totalorder %s309, %s310
      %p322 = scmp.eq.s32.totalorder %s29, 1
      %p323 = por %p321, %p322
      %p325 = scmp.ne.s32.totalorder %s310, %s324
      %p326 = scmp.eq.s32.totalorder %s29, 0
      %p327 = por %p325, %p326
      %s329 = sadd.s32 %s328, 1
      %p332 = scmp.eq.s32.totalorder %s23, 1
      %p333 = scmp.ne.s32.totalorder %s328, %s330
      %p334 = scmp.eq.s32.totalorder %s23, 0
      %p335 = por %p333, %p334
      %p336 = scmp.ne.s32.totalorder %s328, %s330
      %p337 = scmp.eq.s32.totalorder %s28, 1
      %p338 = por %p336, %p337
      %p339 = scmp.ne.s32.totalorder %s330, %s331
      %p340 = scmp.eq.s32.totalorder %s28, 0
      %p341 = por %p339, %p340
      %p342 = scmp.ne.s32.totalorder %s330, %s331
      %p343 = scmp.eq.s32.totalorder %s29, 1
      %p344 = por %p342, %p343
      %p346 = scmp.ne.s32.totalorder %s331, %s345
      %p347 = scmp.eq.s32.totalorder %s29, 0
      %p348 = por %p346, %p347
      %s349 = ssub.s32 %s30, %s42
      %s350 = ssub.s32 %s31, %s38
      %s351 = sor.u32 %s349, %s350
      %p352 = scmp.eq.s32.totalorder %s351, 0
      %s354 = sadd.s32 %s353, 1
      %s355 = scalar_select %p352, %s353, %s354
      %p358 = pneg %p352
      %p359 = scmp.eq.s32.totalorder %s23, 1
      %p360 = por %p358, %p359
      %p361 = scmp.ne.s32.totalorder %s353, %s356
      %p362 = scmp.eq.s32.totalorder %s23, 0
      %p363 = por %p361, %p362
      %p364 = scmp.ne.s32.totalorder %s353, %s356
      %p365 = scmp.eq.s32.totalorder %s28, 1
      %p366 = por %p364, %p365
      %p367 = scmp.ne.s32.totalorder %s356, %s357
      %p368 = scmp.eq.s32.totalorder %s28, 0
      %p369 = por %p367, %p368
      %p370 = scmp.ne.s32.totalorder %s356, %s357
      %p371 = scmp.eq.s32.totalorder %s29, 1
      %p372 = por %p370, %p371
      %p374 = scmp.ne.s32.totalorder %s357, %s373
      %p375 = scmp.eq.s32.totalorder %s29, 0
      %p376 = por %p374, %p375
      %p377 = scmp.le.s32.totalorder 1, %s23
      %p378 = scmp.lt.s32.totalorder %s23, 3
      %p379 = pnand %p377, %p378
      %p380 = pneg %p379
      // Predicated region
      $region9: #{tpu_custom_call.1} parent=5 // pred_check
        _
      $region10: #{tpu_custom_call.1} parent=5 // pred_check_branch
        %382 = sbr.rel (%p379) target = $region12
      $region11: #{tpu_custom_call.1} parent=5 // pred_region
        %s383 = ssub.s32 %s23, 1
        // Predicated region
        $region13: #{tpu_custom_call.1} parent=11 // pred_check
          %p384 = pneg %p110
        $region14: #{tpu_custom_call.1} parent=11 // pred_check_branch
          %386 = sbr.rel (%p384) target = $region16
        $region15: #{tpu_custom_call.1} parent=11 // pred_region
          _
        $region16: #{tpu_custom_call.1} parent=11 // pred_fallthru
          _
        // Predicated region
        $region17: #{tpu_custom_call.1} parent=11 // pred_check
          %p387 = pneg %p131
        $region18: #{tpu_custom_call.1} parent=11 // pred_check_branch
          %389 = sbr.rel (%p387) target = $region20
        $region19: #{tpu_custom_call.1} parent=11 // pred_region
          _
        $region20: #{tpu_custom_call.1} parent=11 // pred_fallthru
          _
        // Predicated region
        $region21: #{tpu_custom_call.1} parent=11 // pred_check
          %p390 = pneg %p152
        $region22: #{tpu_custom_call.1} parent=11 // pred_check_branch
          %392 = sbr.rel (%p390) target = $region24
        $region23: #{tpu_custom_call.1} parent=11 // pred_region
          _
        $region24: #{tpu_custom_call.1} parent=11 // pred_fallthru
          _
        // Predicated region
        $region25: #{tpu_custom_call.1} parent=11 // pred_check
          %p393 = pneg %p173
        $region26: #{tpu_custom_call.1} parent=11 // pred_check_branch
          %395 = sbr.rel (%p393) target = $region28
        $region27: #{tpu_custom_call.1} parent=11 // pred_region
          _
        $region28: #{tpu_custom_call.1} parent=11 // pred_fallthru
          _
        // Predicated region
        $region29: #{tpu_custom_call.1} parent=11 // pred_check
          %p396 = pneg %p194
        $region30: #{tpu_custom_call.1} parent=11 // pred_check_branch
          %398 = sbr.rel (%p396) target = $region32
        $region31: #{tpu_custom_call.1} parent=11 // pred_region
          _
        $region32: #{tpu_custom_call.1} parent=11 // pred_fallthru
          _
        // Predicated region
        $region33: #{tpu_custom_call.1} parent=11 // pred_check
          %p399 = pneg %p215
        $region34: #{tpu_custom_call.1} parent=11 // pred_check_branch
          %401 = sbr.rel (%p399) target = $region36
        $region35: #{tpu_custom_call.1} parent=11 // pred_region
          _
        $region36: #{tpu_custom_call.1} parent=11 // pred_fallthru
          _
        // Predicated region
        $region37: #{tpu_custom_call.1} parent=11 // pred_check
          %p402 = pneg %p236
        $region38: #{tpu_custom_call.1} parent=11 // pred_check_branch
          %404 = sbr.rel (%p402) target = $region40
        $region39: #{tpu_custom_call.1} parent=11 // pred_region
          _
        $region40: #{tpu_custom_call.1} parent=11 // pred_fallthru
          _
        // Predicated region
        $region41: #{tpu_custom_call.1} parent=11 // pred_check
          %p405 = pneg %p257
        $region42: #{tpu_custom_call.1} parent=11 // pred_check_branch
          %407 = sbr.rel (%p405) target = $region44
        $region43: #{tpu_custom_call.1} parent=11 // pred_region
          _
        $region44: #{tpu_custom_call.1} parent=11 // pred_fallthru
          _
        // Predicated region
        $region45: #{tpu_custom_call.1} parent=11 // pred_check
          %p408 = pneg %p278
        $region46: #{tpu_custom_call.1} parent=11 // pred_check_branch
          %410 = sbr.rel (%p408) target = $region48
        $region47: #{tpu_custom_call.1} parent=11 // pred_region
          _
        $region48: #{tpu_custom_call.1} parent=11 // pred_fallthru
          _
        // Predicated region
        $region49: #{tpu_custom_call.1} parent=11 // pred_check
          %p411 = pneg %p299
        $region50: #{tpu_custom_call.1} parent=11 // pred_check_branch
          %413 = sbr.rel (%p411) target = $region52
        $region51: #{tpu_custom_call.1} parent=11 // pred_region
          _
        $region52: #{tpu_custom_call.1} parent=11 // pred_fallthru
          _
        // Predicated region
        $region53: #{tpu_custom_call.1} parent=11 // pred_check
          %p414 = pneg %p320
        $region54: #{tpu_custom_call.1} parent=11 // pred_check_branch
          %416 = sbr.rel (%p414) target = $region56
        $region55: #{tpu_custom_call.1} parent=11 // pred_region
          _
        $region56: #{tpu_custom_call.1} parent=11 // pred_fallthru
          _
        // Predicated region
        $region57: #{tpu_custom_call.1} parent=11 // pred_check
          %p417 = pneg %p341
        $region58: #{tpu_custom_call.1} parent=11 // pred_check_branch
          %419 = sbr.rel (%p417) target = $region60
        $region59: #{tpu_custom_call.1} parent=11 // pred_region
          _
        $region60: #{tpu_custom_call.1} parent=11 // pred_fallthru
          _
      $region12: #{tpu_custom_call.1} parent=5 // pred_fallthru
        _
      %p420 = scmp.lt.s32.totalorder %s23, 2
      // Predicated region
      $region61: #{tpu_custom_call.1} parent=5 // pred_check
        %p421 = pneg %p420
      $region62: #{tpu_custom_call.1} parent=5 // pred_check_branch
        %423 = sbr.rel (%p421) target = $region64
      $region63: #{tpu_custom_call.1} parent=5 // pred_region
        // Predicated region
        $region65: #{tpu_custom_call.1} parent=63 // pred_check
          %p424 = pneg %p55
        $region66: #{tpu_custom_call.1} parent=63 // pred_check_branch
          %426 = sbr.rel (%p424) target = $region68
        $region67: #{tpu_custom_call.1} parent=63 // pred_region
          %p427 = scmp.lt.s32.totalorder %s30, 1
          %s428 = scalar_select %p427, %s30, 1
          %s429 = smul.addr %s428, 8
          %s430 = scalar_lea.vmem %s0, %s429
        $region68: #{tpu_custom_call.1} parent=63 // pred_fallthru
          _
        // Predicated region
        $region69: #{tpu_custom_call.1} parent=63 // pred_check
          %p431 = pneg %p83
        $region70: #{tpu_custom_call.1} parent=63 // pred_check_branch
          %433 = sbr.rel (%p431) target = $region72
        $region71: #{tpu_custom_call.1} parent=63 // pred_region
          %p434 = scmp.lt.s32.totalorder %s30, 1
          %s435 = scalar_select %p434, %s30, 1
          %p436 = scmp.lt.s32.totalorder %s31, 0
          %s437 = scalar_select %p436, %s31, 0
          %s438 = sadd.s32 %s437, %s435
          %s439 = smul.addr %s438, 8
          %s440 = scalar_lea.vmem %s1, %s439
        $region72: #{tpu_custom_call.1} parent=63 // pred_fallthru
          _
      $region64: #{tpu_custom_call.1} parent=5 // pred_fallthru
        _
      %p441 = scmp.le.s32.totalorder 1, %s23
      %p442 = scmp.lt.s32.totalorder %s23, 3
      %p443 = pnand %p441, %p442
      %p444 = pneg %p443
      // Predicated region
      $region73: #{tpu_custom_call.1} parent=5 // pred_check
        _
      $region74: #{tpu_custom_call.1} parent=5 // pred_check_branch
        %446 = sbr.rel (%p443) target = $region76
      $region75: #{tpu_custom_call.1} parent=5 // pred_region
        %s447 = ssub.s32 %s23, 1
        %p448 = scmp.lt.s32.totalorder %s32, 1
        %s449 = scalar_select %p448, %s32, 1
        %s450 = smul.addr %s449, 8
        %s451 = scalar_lea.vmem %s0, %s450
        %p452 = pneg %p61
        %p453 = pneg %p58
        %p454 = scmp.lt.s32.totalorder %s32, 1
        %s455 = scalar_select %p454, %s32, 1
        %p456 = scmp.lt.s32.totalorder %s33, 0
        %s457 = scalar_select %p456, %s33, 0
        %s458 = sadd.s32 %s457, %s455
        %s459 = smul.addr %s458, 8
        %s460 = scalar_lea.vmem %s1, %s459
        %p461 = pneg %p89
        %p462 = pneg %p86
        %p463 = pneg %p110
        %p464 = pneg %p107
        %p465 = pneg %p131
        %p466 = pneg %p128
        %p467 = pneg %p152
        %p468 = pneg %p149
        %p469 = pneg %p173
        %p470 = pneg %p170
        %p471 = pneg %p194
        %p472 = pneg %p191
        %p473 = pneg %p215
        %p474 = pneg %p212
        %p475 = pneg %p236
        %p476 = pneg %p233
        %p477 = pneg %p257
        %p478 = pneg %p254
        %p479 = pneg %p278
        %p480 = pneg %p275
        %p481 = pneg %p299
        %p482 = pneg %p296
        %p483 = pneg %p320
        %p484 = pneg %p317
        %p485 = pneg %p341
        %p486 = pneg %p338
        %p487 = pneg %p369
        %p488 = pneg %p366
        %s489 = sand.u32 %s356, 1
        %s490 = scalar_lea.sflag [#allocation7], %s489
        %s491 = sand.u32 %s356, 1
        %s492 = smul.addr %s491, 8
        %s493 = scalar_lea.vmem [#allocation6], %s492
        %p494 = scmp.lt.s32.totalorder %s32, 1
        %s495 = scalar_select %p494, %s32, 1
        %s496 = smul.addr %s495, 8
        %s497 = scalar_lea.vmem %s0, %s496
        %p498 = scmp.lt.s32.totalorder %s32, 1
        %s499 = scalar_select %p498, %s32, 1
        %p500 = scmp.lt.s32.totalorder %s33, 0
        %s501 = scalar_select %p500, %s33, 0
        %s502 = sadd.s32 %s501, %s499
        %s503 = smul.addr %s502, 8
        %s504 = scalar_lea.vmem %s1, %s503
        %p505 = scmp.eq.s32.totalorder %s33, 0
        // Predicated region
        $region77: #{tpu_custom_call.1} parent=75 // pred_check
          %p506 = pneg %p505
        $region78: #{tpu_custom_call.1} parent=75 // pred_check_branch
          %508 = sbr.rel (%p506) target = $region80
        $region79: #{tpu_custom_call.1} parent=75 // pred_region
          %v509 = vld [vmem:[%s497] sm:$0xff]
          %v510 = vld [vmem:[%s2] sm:$0x1]
          %v511 = vld [vmem:[%s3] sm:$0x1]
          %vm512 = vcmask 261120
          %v513 = vsel %vm512, %v509, 0.0
          %514 = vadd.xlane.f32.xlu0 %v513
          %v515 = vpop.xlane.xlu0 %514
          %v516 = vrcp.pop 32.0
          %v517 = vmul.f32 %v515, %v516
          %v518 = vsub.f32 %v509, %v517
          %v519 = vmul.f32 %v518, %v518
          %v520 = vsel %vm512, %v519, 0.0
          %521 = vadd.xlane.f32.xlu0 %v520
          %v522 = vpop.xlane.xlu0 %521
          %v523 = vmul.f32 %v522, %v516
          %v524 = vadd.f32 %v523, 1e-05
          %v525 = vrsqrt.pop %v524
          %v526 = vmul.f32 %v518, %v525
          %v528 = vlaneseq
          %v529 = vshrl.u32 %v528, 7
          %v530 = vsub.s32 0, %v529
          %v531 = vrot.slane %v510, %v530
          %v533 = vmul.f32 %v526, %v531
          %v535 = vlaneseq
          %v536 = vshrl.u32 %v535, 7
          %v537 = vsub.s32 0, %v536
          %v538 = vrot.slane %v511, %v537
          %v540 = vadd.f32 %v533, %v538
          %v541 = vld [vmem:[%s4] sm:$0xff]
          %v542 = vld [vmem:[%s4 + $0x8] sm:$0xff]
          %v543 = vld [vmem:[%s4 + $0x10] sm:$0xff]
          %v544 = vld [vmem:[%s4 + $0x18] sm:$0xff]
          %v545 = vld [vmem:[%s5] sm:$0x1]
          %v547 = vlaneseq
          %v548 = vshrl.u32 %v547, 7
          %v549 = vsub.s32 0, %v548
          %v550 = vrot.slane %v545, %v549
          %v553 = vsel %vm512, %v540, 0
          %555 = vmatprep.subr.mxu0 0.0
          %556 = vmatpush1.msra.mxu0 %v541
          %557 = vmatprep.subr.mxu0 0.0
          %558 = vmatpush1.msra.mxu0 %v542
          %559 = vmatprep.subr.mxu0 0.0
          %560 = vmatpush1.msra.mxu0 %v543
          %561 = vmatprep.subr.mxu0 0.0
          %562 = vmatpush1.msra.mxu0 %v544
          %563 = vmatprep.subr.mxu0 0.0
          %564 = vmatpush1.msra.mxu0 0.0
          %565 = vmatprep.subr.mxu0 0.0
          %566 = vmatpush1.msra.mxu0 0.0
          %567 = vmatprep.subr.mxu0 0.0
          %568 = vmatpush1.msra.mxu0 0.0
          %569 = vmatprep.subr.mxu0 0.0
          %570 = vmatpush1.msra.mxu0 0.0
          %571 = vmatprep.subr.mxu0 0.0
          %572 = vmatpush1.msra.mxu0 0.0
          %573 = vmatprep.subr.mxu0 0.0
          %574 = vmatpush1.msra.mxu0 0.0
          %575 = vmatprep.subr.mxu0 0.0
          %576 = vmatpush1.msra.mxu0 0.0
          %577 = vmatprep.subr.mxu0 0.0
          %578 = vmatpush1.msra.mxu0 0.0
          %579 = vmatprep.subr.mxu0 0.0
          %580 = vmatpush1.msra.mxu0 0.0
          %581 = vmatprep.subr.mxu0 0.0
          %582 = vmatpush1.msra.mxu0 0.0
          %583 = vmatprep.subr.mxu0 0.0
          %584 = vmatpush1.msra.mxu0 0.0
          %585 = vmatprep.subr.mxu0 0.0
          %586 = vmatpush1.msra.mxu0 0.0
          %587 = vmatprep.subr.mxu0 0.0
          %588 = vmatpush1.msra.mxu0 0.0
          %589 = vmatprep.subr.mxu0 0.0
          %590 = vmatpush1.msra.mxu0 0.0
          %591 = vmatprep.subr.mxu0 0.0
          %592 = vmatpush1.msra.mxu0 0.0
          %593 = vmatprep.subr.mxu0 0.0
          %594 = vmatpush1.msra.mxu0 0.0
          %595 = vmatprep.subr.mxu0 0.0
          %596 = vmatpush1.msra.mxu0 0.0
          %597 = vmatprep.subr.mxu0 0.0
          %598 = vmatpush1.msra.mxu0 0.0
          %599 = vmatprep.subr.mxu0 0.0
          %600 = vmatpush1.msra.mxu0 0.0
          %601 = vmatprep.subr.mxu0 0.0
          %602 = vmatpush1.msra.mxu0 0.0
          %603 = vmatprep.subr.mxu0 0.0
          %604 = vmatpush1.msra.mxu0 0.0
          %605 = vmatprep.subr.mxu0 0.0
          %606 = vmatpush1.msra.mxu0 0.0
          %607 = vmatprep.subr.mxu0 0.0
          %608 = vmatpush1.msra.mxu0 0.0
          %609 = vmatprep.subr.mxu0 0.0
          %610 = vmatpush1.msra.mxu0 0.0
          %611 = vmatprep.subr.mxu0 0.0
          %612 = vmatpush1.msra.mxu0 0.0
          %613 = vmatprep.subr.mxu0 0.0
          %614 = vmatpush1.msra.mxu0 0.0
          %615 = vmatprep.subr.mxu0 0.0
          %616 = vmatpush1.msra.mxu0 0.0
          %617 = vmatprep.subr.mxu0 0.0
          %618 = vmatpush1.msra.mxu0 0.0
          %619 = vmatprep.mubr.f32.mxu0 0.0
          %620 = vmatmul.mubr.f32.gmra.mrb[0].mxu0 %v553
          %v621 = vpop.f32.mrb[0].mxu0
          %v622 = vadd.f32 %v550, %v621
          %v623 = vpop.f32.mrb[0].mxu0
          %624 = vdwg.mxu0
          %v625 = vmul.f32 %v622, 0.35355338
          %vm626 = vcmask 64512
          %627 = vst.msk [vmem:[#allocation2] sm:$0xff] %vm626, %v625
          %629 = vrot.lane.b32.xlu0 %v622, 96
          %v630 = vpop.permute.xlu0 %629
          %632 = vst.msk [vmem:[#allocation3] sm:$0xff] %vm626, %v630
          %633 = vrot.lane.b32.xlu0 %v622, 64
          %v634 = vpop.permute.xlu0 %633
          %636 = vst.msk [vmem:[#allocation4] sm:$0xff] %vm626, %v634
          %638 = vrot.lane.b32.xlu0 %v625, 120
          %v639 = vpop.permute.xlu0 %638
          %s641 = scalar_lea.vmem [#allocation2], 8
          %642 = vst.msk [vmem:[%s641] sm:$0xff] %vm626, %v639
          %643 = vrot.lane.b32.xlu0 %v622, 88
          %v644 = vpop.permute.xlu0 %643
          %s646 = scalar_lea.vmem [#allocation3], 8
          %647 = vst.msk [vmem:[%s646] sm:$0xff] %vm626, %v644
          %648 = vrot.lane.b32.xlu0 %v622, 56
          %v649 = vpop.permute.xlu0 %648
          %s651 = scalar_lea.vmem [#allocation4], 8
          %652 = vst.msk [vmem:[%s651] sm:$0xff] %vm626, %v649
          %653 = vrot.lane.b32.xlu0 %v625, 112
          %v654 = vpop.permute.xlu0 %653
          %s656 = scalar_lea.vmem [#allocation2], 16
          %657 = vst.msk [vmem:[%s656] sm:$0xff] %vm626, %v654
          %658 = vrot.lane.b32.xlu0 %v622, 80
          %v659 = vpop.permute.xlu0 %658
          %s661 = scalar_lea.vmem [#allocation3], 16
          %662 = vst.msk [vmem:[%s661] sm:$0xff] %vm626, %v659
          %663 = vrot.lane.b32.xlu0 %v622, 48
          %v664 = vpop.permute.xlu0 %663
          %s666 = scalar_lea.vmem [#allocation4], 16
          %667 = vst.msk [vmem:[%s666] sm:$0xff] %vm626, %v664
          %668 = vrot.lane.b32.xlu0 %v625, 104
          %v669 = vpop.permute.xlu0 %668
          %s671 = scalar_lea.vmem [#allocation2], 24
          %672 = vst.msk [vmem:[%s671] sm:$0xff] %vm626, %v669
          %673 = vrot.lane.b32.xlu0 %v622, 72
          %v674 = vpop.permute.xlu0 %673
          %s676 = scalar_lea.vmem [#allocation3], 24
          %677 = vst.msk [vmem:[%s676] sm:$0xff] %vm626, %v674
          %678 = vrot.lane.b32.xlu0 %v622, 40
          %v679 = vpop.permute.xlu0 %678
          %s681 = scalar_lea.vmem [#allocation4], 24
          %682 = vst.msk [vmem:[%s681] sm:$0xff] %vm626, %v679
        $region80: #{tpu_custom_call.1} parent=75 // pred_fallthru
          _
        %s683 = smul.u32 %s33, 8
        %s684 = scalar_lea.vmem [#allocation2], %s683
        %v685 = vld [vmem:[%s684] sm:$0xff]
        %v686 = vld [vmem:[%s684 + $0x8] sm:$0xff]
        %v687 = vld [vmem:[%s684 + $0x10] sm:$0xff]
        %v688 = vld [vmem:[%s684 + $0x18] sm:$0xff]
        %v689 = vlaneseq
        %v690 = vshrl.u32 %v689, 7
        %v691 = vstv %s683
        %v692 = vadd.s32 %v690, %v691
        %v693 = vlaneseq
        %v694 = vand.u32 %v693, 127
        %vm695 = vcmp.le.s32.totalorder %v694, %v692
        %v696 = vld [vmem:[#allocation3] sm:$0xff]
        %v697 = vld [vmem:[#allocation3 + $0x8] sm:$0xff]
        %v698 = vld [vmem:[#allocation3 + $0x10] sm:$0xff]
        %v699 = vld [vmem:[#allocation3 + $0x18] sm:$0xff]
        %vm700 = vcmask 64512
        %v702 = vsel %vm700, %v685, 0
        %v705 = vsel %vm700, %v696, 0
        %707 = vmatprep.subr.mxu0 0.0
        %708 = vmatpush1.xpose.msra.mxu0 %v705
        %709 = vmatprep.subr.mxu0 0.0
        %710 = vmatpush1.xpose.msra.mxu0 0.0
        %711 = vmatprep.subr.mxu0 0.0
        %712 = vmatpush1.xpose.msra.mxu0 0.0
        %713 = vmatprep.subr.mxu0 0.0
        %714 = vmatpush1.xpose.msra.mxu0 0.0
        %715 = vmatprep.subr.mxu0 0.0
        %716 = vmatpush1.xpose.msra.mxu0 0.0
        %717 = vmatprep.subr.mxu0 0.0
        %718 = vmatpush1.xpose.msra.mxu0 0.0
        %719 = vmatprep.subr.mxu0 0.0
        %720 = vmatpush1.xpose.msra.mxu0 0.0
        %721 = vmatprep.subr.mxu0 0.0
        %722 = vmatpush1.xpose.msra.mxu0 0.0
        %723 = vmatprep.subr.mxu0 0.0
        %724 = vmatpush1.xpose.msra.mxu0 0.0
        %725 = vmatprep.subr.mxu0 0.0
        %726 = vmatpush1.xpose.msra.mxu0 0.0
        %727 = vmatprep.subr.mxu0 0.0
        %728 = vmatpush1.xpose.msra.mxu0 0.0
        %729 = vmatprep.subr.mxu0 0.0
        %730 = vmatpush1.xpose.msra.mxu0 0.0
        %731 = vmatprep.subr.mxu0 0.0
        %732 = vmatpush1.xpose.msra.mxu0 0.0
        %733 = vmatprep.subr.mxu0 0.0
        %734 = vmatpush1.xpose.msra.mxu0 0.0
        %735 = vmatprep.subr.mxu0 0.0
        %736 = vmatpush1.xpose.msra.mxu0 0.0
        %737 = vmatprep.subr.mxu0 0.0
        %738 = vmatpush1.xpose.msra.mxu0 0.0
        %739 = vmatprep.subr.mxu0 0.0
        %740 = vmatpush1.xpose.msra.mxu0 0.0
        %741 = vmatprep.subr.mxu0 0.0
        %742 = vmatpush1.xpose.msra.mxu0 0.0
        %743 = vmatprep.subr.mxu0 0.0
        %744 = vmatpush1.xpose.msra.mxu0 0.0
        %745 = vmatprep.subr.mxu0 0.0
        %746 = vmatpush1.xpose.msra.mxu0 0.0
        %747 = vmatprep.subr.mxu0 0.0
        %748 = vmatpush1.xpose.msra.mxu0 0.0
        %749 = vmatprep.subr.mxu0 0.0
        %750 = vmatpush1.xpose.msra.mxu0 0.0
        %751 = vmatprep.subr.mxu0 0.0
        %752 = vmatpush1.xpose.msra.mxu0 0.0
        %753 = vmatprep.subr.mxu0 0.0
        %754 = vmatpush1.xpose.msra.mxu0 0.0
        %755 = vmatprep.subr.mxu0 0.0
        %756 = vmatpush1.xpose.msra.mxu0 0.0
        %757 = vmatprep.subr.mxu0 0.0
        %758 = vmatpush1.xpose.msra.mxu0 0.0
        %759 = vmatprep.subr.mxu0 0.0
        %760 = vmatpush1.xpose.msra.mxu0 0.0
        %761 = vmatprep.subr.mxu0 0.0
        %762 = vmatpush1.xpose.msra.mxu0 0.0
        %763 = vmatprep.subr.mxu0 0.0
        %764 = vmatpush1.xpose.msra.mxu0 0.0
        %765 = vmatprep.subr.mxu0 0.0
        %766 = vmatpush1.xpose.msra.mxu0 0.0
        %767 = vmatprep.subr.mxu0 0.0
        %768 = vmatpush1.xpose.msra.mxu0 0.0
        %769 = vmatprep.subr.mxu0 0.0
        %770 = vmatpush1.xpose.msra.mxu0 0.0
        %771 = vmatprep.mubr.f32.mxu0 0.0
        %772 = vmatmul.mubr.f32.gmra.mrb[0].mxu0 %v702
        %v773 = vpop.f32.mrb[0].mxu0
        %v774 = vadd.f32 0.0, %v773
        %v775 = vpop.f32.mrb[0].mxu0
        %776 = vdwg.mxu0
        %v778 = vsel %vm700, %v686, 0
        %v781 = vsel %vm700, %v697, 0
        %783 = vmatprep.subr.mxu0 0.0
        %784 = vmatpush1.xpose.msra.mxu0 %v781
        %785 = vmatprep.subr.mxu0 0.0
        %786 = vmatpush1.xpose.msra.mxu0 0.0
        %787 = vmatprep.subr.mxu0 0.0
        %788 = vmatpush1.xpose.msra.mxu0 0.0
        %789 = vmatprep.subr.mxu0 0.0
        %790 = vmatpush1.xpose.msra.mxu0 0.0
        %791 = vmatprep.subr.mxu0 0.0
        %792 = vmatpush1.xpose.msra.mxu0 0.0
        %793 = vmatprep.subr.mxu0 0.0
        %794 = vmatpush1.xpose.msra.mxu0 0.0
        %795 = vmatprep.subr.mxu0 0.0
        %796 = vmatpush1.xpose.msra.mxu0 0.0
        %797 = vmatprep.subr.mxu0 0.0
        %798 = vmatpush1.xpose.msra.mxu0 0.0
        %799 = vmatprep.subr.mxu0 0.0
        %800 = vmatpush1.xpose.msra.mxu0 0.0
        %801 = vmatprep.subr.mxu0 0.0
        %802 = vmatpush1.xpose.msra.mxu0 0.0
        %803 = vmatprep.subr.mxu0 0.0
        %804 = vmatpush1.xpose.msra.mxu0 0.0
        %805 = vmatprep.subr.mxu0 0.0
        %806 = vmatpush1.xpose.msra.mxu0 0.0
        %807 = vmatprep.subr.mxu0 0.0
        %808 = vmatpush1.xpose.msra.mxu0 0.0
        %809 = vmatprep.subr.mxu0 0.0
        %810 = vmatpush1.xpose.msra.mxu0 0.0
        %811 = vmatprep.subr.mxu0 0.0
        %812 = vmatpush1.xpose.msra.mxu0 0.0
        %813 = vmatprep.subr.mxu0 0.0
        %814 = vmatpush1.xpose.msra.mxu0 0.0
        %815 = vmatprep.subr.mxu0 0.0
        %816 = vmatpush1.xpose.msra.mxu0 0.0
        %817 = vmatprep.subr.mxu0 0.0
        %818 = vmatpush1.xpose.msra.mxu0 0.0
        %819 = vmatprep.subr.mxu0 0.0
        %820 = vmatpush1.xpose.msra.mxu0 0.0
        %821 = vmatprep.subr.mxu0 0.0
        %822 = vmatpush1.xpose.msra.mxu0 0.0
        %823 = vmatprep.subr.mxu0 0.0
        %824 = vmatpush1.xpose.msra.mxu0 0.0
        %825 = vmatprep.subr.mxu0 0.0
        %826 = vmatpush1.xpose.msra.mxu0 0.0
        %827 = vmatprep.subr.mxu0 0.0
        %828 = vmatpush1.xpose.msra.mxu0 0.0
        %829 = vmatprep.subr.mxu0 0.0
        %830 = vmatpush1.xpose.msra.mxu0 0.0
        %831 = vmatprep.subr.mxu0 0.0
        %832 = vmatpush1.xpose.msra.mxu0 0.0
        %833 = vmatprep.subr.mxu0 0.0
        %834 = vmatpush1.xpose.msra.mxu0 0.0
        %835 = vmatprep.subr.mxu0 0.0
        %836 = vmatpush1.xpose.msra.mxu0 0.0
        %837 = vmatprep.subr.mxu0 0.0
        %838 = vmatpush1.xpose.msra.mxu0 0.0
        %839 = vmatprep.subr.mxu0 0.0
        %840 = vmatpush1.xpose.msra.mxu0 0.0
        %841 = vmatprep.subr.mxu0 0.0
        %842 = vmatpush1.xpose.msra.mxu0 0.0
        %843 = vmatprep.subr.mxu0 0.0
        %844 = vmatpush1.xpose.msra.mxu0 0.0
        %845 = vmatprep.subr.mxu0 0.0
        %846 = vmatpush1.xpose.msra.mxu0 0.0
        %847 = vmatprep.mubr.f32.mxu0 0.0
        %848 = vmatmul.mubr.f32.gmra.mrb[0].mxu0 %v778
        %v849 = vpop.f32.mrb[0].mxu0
        %v850 = vadd.f32 0.0, %v849
        %v851 = vpop.f32.mrb[0].mxu0
        %852 = vdwg.mxu0
        %v854 = vsel %vm700, %v687, 0
        %v857 = vsel %vm700, %v698, 0
        %859 = vmatprep.subr.mxu0 0.0
        %860 = vmatpush1.xpose.msra.mxu0 %v857
        %861 = vmatprep.subr.mxu0 0.0
        %862 = vmatpush1.xpose.msra.mxu0 0.0
        %863 = vmatprep.subr.mxu0 0.0
        %864 = vmatpush1.xpose.msra.mxu0 0.0
        %865 = vmatprep.subr.mxu0 0.0
        %866 = vmatpush1.xpose.msra.mxu0 0.0
        %867 = vmatprep.subr.mxu0 0.0
        %868 = vmatpush1.xpose.msra.mxu0 0.0
        %869 = vmatprep.subr.mxu0 0.0
        %870 = vmatpush1.xpose.msra.mxu0 0.0
        %871 = vmatprep.subr.mxu0 0.0
        %872 = vmatpush1.xpose.msra.mxu0 0.0
        %873 = vmatprep.subr.mxu0 0.0
        %874 = vmatpush1.xpose.msra.mxu0 0.0
        %875 = vmatprep.subr.mxu0 0.0
        %876 = vmatpush1.xpose.msra.mxu0 0.0
        %877 = vmatprep.subr.mxu0 0.0
        %878 = vmatpush1.xpose.msra.mxu0 0.0
        %879 = vmatprep.subr.mxu0 0.0
        %880 = vmatpush1.xpose.msra.mxu0 0.0
        %881 = vmatprep.subr.mxu0 0.0
        %882 = vmatpush1.xpose.msra.mxu0 0.0
        %883 = vmatprep.subr.mxu0 0.0
        %884 = vmatpush1.xpose.msra.mxu0 0.0
        %885 = vmatprep.subr.mxu0 0.0
        %886 = vmatpush1.xpose.msra.mxu0 0.0
        %887 = vmatprep.subr.mxu0 0.0
        %888 = vmatpush1.xpose.msra.mxu0 0.0
        %889 = vmatprep.subr.mxu0 0.0
        %890 = vmatpush1.xpose.msra.mxu0 0.0
        %891 = vmatprep.subr.mxu0 0.0
        %892 = vmatpush1.xpose.msra.mxu0 0.0
        %893 = vmatprep.subr.mxu0 0.0
        %894 = vmatpush1.xpose.msra.mxu0 0.0
        %895 = vmatprep.subr.mxu0 0.0
        %896 = vmatpush1.xpose.msra.mxu0 0.0
        %897 = vmatprep.subr.mxu0 0.0
        %898 = vmatpush1.xpose.msra.mxu0 0.0
        %899 = vmatprep.subr.mxu0 0.0
        %900 = vmatpush1.xpose.msra.mxu0 0.0
        %901 = vmatprep.subr.mxu0 0.0
        %902 = vmatpush1.xpose.msra.mxu0 0.0
        %903 = vmatprep.subr.mxu0 0.0
        %904 = vmatpush1.xpose.msra.mxu0 0.0
        %905 = vmatprep.subr.mxu0 0.0
        %906 = vmatpush1.xpose.msra.mxu0 0.0
        %907 = vmatprep.subr.mxu0 0.0
        %908 = vmatpush1.xpose.msra.mxu0 0.0
        %909 = vmatprep.subr.mxu0 0.0
        %910 = vmatpush1.xpose.msra.mxu0 0.0
        %911 = vmatprep.subr.mxu0 0.0
        %912 = vmatpush1.xpose.msra.mxu0 0.0
        %913 = vmatprep.subr.mxu0 0.0
        %914 = vmatpush1.xpose.msra.mxu0 0.0
        %915 = vmatprep.subr.mxu0 0.0
        %916 = vmatpush1.xpose.msra.mxu0 0.0
        %917 = vmatprep.subr.mxu0 0.0
        %918 = vmatpush1.xpose.msra.mxu0 0.0
        %919 = vmatprep.subr.mxu0 0.0
        %920 = vmatpush1.xpose.msra.mxu0 0.0
        %921 = vmatprep.subr.mxu0 0.0
        %922 = vmatpush1.xpose.msra.mxu0 0.0
        %923 = vmatprep.mubr.f32.mxu0 0.0
        %924 = vmatmul.mubr.f32.gmra.mrb[0].mxu0 %v854
        %v925 = vpop.f32.mrb[0].mxu0
        %v926 = vadd.f32 0.0, %v925
        %v927 = vpop.f32.mrb[0].mxu0
        %928 = vdwg.mxu0
        %v930 = vsel %vm700, %v688, 0
        %v933 = vsel %vm700, %v699, 0
        %935 = vmatprep.subr.mxu0 0.0
        %936 = vmatpush1.xpose.msra.mxu0 %v933
        %937 = vmatprep.subr.mxu0 0.0
        %938 = vmatpush1.xpose.msra.mxu0 0.0
        %939 = vmatprep.subr.mxu0 0.0
        %940 = vmatpush1.xpose.msra.mxu0 0.0
        %941 = vmatprep.subr.mxu0 0.0
        %942 = vmatpush1.xpose.msra.mxu0 0.0
        %943 = vmatprep.subr.mxu0 0.0
        %944 = vmatpush1.xpose.msra.mxu0 0.0
        %945 = vmatprep.subr.mxu0 0.0
        %946 = vmatpush1.xpose.msra.mxu0 0.0
        %947 = vmatprep.subr.mxu0 0.0
        %948 = vmatpush1.xpose.msra.mxu0 0.0
        %949 = vmatprep.subr.mxu0 0.0
        %950 = vmatpush1.xpose.msra.mxu0 0.0
        %951 = vmatprep.subr.mxu0 0.0
        %952 = vmatpush1.xpose.msra.mxu0 0.0
        %953 = vmatprep.subr.mxu0 0.0
        %954 = vmatpush1.xpose.msra.mxu0 0.0
        %955 = vmatprep.subr.mxu0 0.0
        %956 = vmatpush1.xpose.msra.mxu0 0.0
        %957 = vmatprep.subr.mxu0 0.0
        %958 = vmatpush1.xpose.msra.mxu0 0.0
        %959 = vmatprep.subr.mxu0 0.0
        %960 = vmatpush1.xpose.msra.mxu0 0.0
        %961 = vmatprep.subr.mxu0 0.0
        %962 = vmatpush1.xpose.msra.mxu0 0.0
        %963 = vmatprep.subr.mxu0 0.0
        %964 = vmatpush1.xpose.msra.mxu0 0.0
        %965 = vmatprep.subr.mxu0 0.0
        %966 = vmatpush1.xpose.msra.mxu0 0.0
        %967 = vmatprep.subr.mxu0 0.0
        %968 = vmatpush1.xpose.msra.mxu0 0.0
        %969 = vmatprep.subr.mxu0 0.0
        %970 = vmatpush1.xpose.msra.mxu0 0.0
        %971 = vmatprep.subr.mxu0 0.0
        %972 = vmatpush1.xpose.msra.mxu0 0.0
        %973 = vmatprep.subr.mxu0 0.0
        %974 = vmatpush1.xpose.msra.mxu0 0.0
        %975 = vmatprep.subr.mxu0 0.0
        %976 = vmatpush1.xpose.msra.mxu0 0.0
        %977 = vmatprep.subr.mxu0 0.0
        %978 = vmatpush1.xpose.msra.mxu0 0.0
        %979 = vmatprep.subr.mxu0 0.0
        %980 = vmatpush1.xpose.msra.mxu0 0.0
        %981 = vmatprep.subr.mxu0 0.0
        %982 = vmatpush1.xpose.msra.mxu0 0.0
        %983 = vmatprep.subr.mxu0 0.0
        %984 = vmatpush1.xpose.msra.mxu0 0.0
        %985 = vmatprep.subr.mxu0 0.0
        %986 = vmatpush1.xpose.msra.mxu0 0.0
        %987 = vmatprep.subr.mxu0 0.0
        %988 = vmatpush1.xpose.msra.mxu0 0.0
        %989 = vmatprep.subr.mxu0 0.0
        %990 = vmatpush1.xpose.msra.mxu0 0.0
        %991 = vmatprep.subr.mxu0 0.0
        %992 = vmatpush1.xpose.msra.mxu0 0.0
        %993 = vmatprep.subr.mxu0 0.0
        %994 = vmatpush1.xpose.msra.mxu0 0.0
        %995 = vmatprep.subr.mxu0 0.0
        %996 = vmatpush1.xpose.msra.mxu0 0.0
        %997 = vmatprep.subr.mxu0 0.0
        %998 = vmatpush1.xpose.msra.mxu0 0.0
        %999 = vmatprep.mubr.f32.mxu0 0.0
        %1000 = vmatmul.mubr.f32.gmra.mrb[0].mxu0 %v930
        %v1001 = vpop.f32.mrb[0].mxu0
        %v1002 = vadd.f32 0.0, %v1001
        %v1003 = vpop.f32.mrb[0].mxu0
        %1004 = vdwg.mxu0
        %v1005 = vsel %vm695, 1, 0
        %vm1006 = vcmp.eq.s32.totalorder %v1005, 1
        %v1007 = vsel %vm1006, %v774, -inf
        %v1008 = vsel %vm1006, %v850, -inf
        %v1009 = vsel %vm1006, %v926, -inf
        %v1010 = vsel %vm1006, %v1002, -inf
        %v1011 = vsel %vm700, %v1007, -inf
        %1012 = vmax.xlane.f32.xlu0 %v1011
        %v1013 = vpop.xlane.xlu0 %1012
        %v1014 = vsel %vm700, %v1008, -inf
        %1015 = vmax.xlane.f32.xlu0 %v1014
        %v1016 = vpop.xlane.xlu0 %1015
        %v1017 = vsel %vm700, %v1009, -inf
        %1018 = vmax.xlane.f32.xlu0 %v1017
        %v1019 = vpop.xlane.xlu0 %1018
        %v1020 = vsel %vm700, %v1010, -inf
        %1021 = vmax.xlane.f32.xlu0 %v1020
        %v1022 = vpop.xlane.xlu0 %1021
        %v1023 = vsub.f32 %v1007, %v1013
        %v1024 = vsub.f32 %v1008, %v1016
        %v1025 = vsub.f32 %v1009, %v1019
        %v1026 = vsub.f32 %v1010, %v1022
        %v1027 = vmul.f32 %v1023, 1.442695
        %v1028 = vpow.pop %v1027
        %v1029 = vmul.f32 %v1024, 1.442695
        %v1030 = vpow.pop %v1029
        %v1031 = vmul.f32 %v1025, 1.442695
        %v1032 = vpow.pop %v1031
        %v1033 = vmul.f32 %v1026, 1.442695
        %v1034 = vpow.pop %v1033
        %v1035 = vsel %vm700, %v1028, 0.0
        %1036 = vadd.xlane.f32.xlu0 %v1035
        %v1037 = vpop.xlane.xlu0 %1036
        %v1038 = vsel %vm700, %v1030, 0.0
        %1039 = vadd.xlane.f32.xlu0 %v1038
        %v1040 = vpop.xlane.xlu0 %1039
        %v1041 = vsel %vm700, %v1032, 0.0
        %1042 = vadd.xlane.f32.xlu0 %v1041
        %v1043 = vpop.xlane.xlu0 %1042
        %v1044 = vsel %vm700, %v1034, 0.0
        %1045 = vadd.xlane.f32.xlu0 %v1044
        %v1046 = vpop.xlane.xlu0 %1045
        %v1047 = vrcp.pop %v1037
        %v1048 = vrcp.pop %v1040
        %v1049 = vrcp.pop %v1043
        %v1050 = vrcp.pop %v1046
        %v1051 = vmul.f32 %v1028, %v1047
        %v1052 = vmul.f32 %v1030, %v1048
        %v1053 = vmul.f32 %v1032, %v1049
        %v1054 = vmul.f32 %v1034, %v1050
        %v1055 = vld [vmem:[#allocation4] sm:$0xff]
        %v1056 = vld [vmem:[#allocation4 + $0x8] sm:$0xff]
        %v1057 = vld [vmem:[#allocation4 + $0x10] sm:$0xff]
        %v1058 = vld [vmem:[#allocation4 + $0x18] sm:$0xff]
        %v1060 = vsel %vm700, %v1051, 0
        %1062 = vmatprep.subr.mxu0 0.0
        %1063 = vmatpush1.msra.mxu0 %v1055
        %1064 = vmatprep.subr.mxu0 0.0
        %1065 = vmatpush1.msra.mxu0 0.0
        %1066 = vmatprep.subr.mxu0 0.0
        %1067 = vmatpush1.msra.mxu0 0.0
        %1068 = vmatprep.subr.mxu0 0.0
        %1069 = vmatpush1.msra.mxu0 0.0
        %1070 = vmatprep.subr.mxu0 0.0
        %1071 = vmatpush1.msra.mxu0 0.0
        %1072 = vmatprep.subr.mxu0 0.0
        %1073 = vmatpush1.msra.mxu0 0.0
        %1074 = vmatprep.subr.mxu0 0.0
        %1075 = vmatpush1.msra.mxu0 0.0
        %1076 = vmatprep.subr.mxu0 0.0
        %1077 = vmatpush1.msra.mxu0 0.0
        %1078 = vmatprep.subr.mxu0 0.0
        %1079 = vmatpush1.msra.mxu0 0.0
        %1080 = vmatprep.subr.mxu0 0.0
        %1081 = vmatpush1.msra.mxu0 0.0
        %1082 = vmatprep.subr.mxu0 0.0
        %1083 = vmatpush1.msra.mxu0 0.0
        %1084 = vmatprep.subr.mxu0 0.0
        %1085 = vmatpush1.msra.mxu0 0.0
        %1086 = vmatprep.subr.mxu0 0.0
        %1087 = vmatpush1.msra.mxu0 0.0
        %1088 = vmatprep.subr.mxu0 0.0
        %1089 = vmatpush1.msra.mxu0 0.0
        %1090 = vmatprep.subr.mxu0 0.0
        %1091 = vmatpush1.msra.mxu0 0.0
        %1092 = vmatprep.subr.mxu0 0.0
        %1093 = vmatpush1.msra.mxu0 0.0
        %1094 = vmatprep.subr.mxu0 0.0
        %1095 = vmatpush1.msra.mxu0 0.0
        %1096 = vmatprep.subr.mxu0 0.0
        %1097 = vmatpush1.msra.mxu0 0.0
        %1098 = vmatprep.subr.mxu0 0.0
        %1099 = vmatpush1.msra.mxu0 0.0
        %1100 = vmatprep.subr.mxu0 0.0
        %1101 = vmatpush1.msra.mxu0 0.0
        %1102 = vmatprep.subr.mxu0 0.0
        %1103 = vmatpush1.msra.mxu0 0.0
        %1104 = vmatprep.subr.mxu0 0.0
        %1105 = vmatpush1.msra.mxu0 0.0
        %1106 = vmatprep.subr.mxu0 0.0
        %1107 = vmatpush1.msra.mxu0 0.0
        %1108 = vmatprep.subr.mxu0 0.0
        %1109 = vmatpush1.msra.mxu0 0.0
        %1110 = vmatprep.subr.mxu0 0.0
        %1111 = vmatpush1.msra.mxu0 0.0
        %1112 = vmatprep.subr.mxu0 0.0
        %1113 = vmatpush1.msra.mxu0 0.0
        %1114 = vmatprep.subr.mxu0 0.0
        %1115 = vmatpush1.msra.mxu0 0.0
        %1116 = vmatprep.subr.mxu0 0.0
        %1117 = vmatpush1.msra.mxu0 0.0
        %1118 = vmatprep.subr.mxu0 0.0
        %1119 = vmatpush1.msra.mxu0 0.0
        %1120 = vmatprep.subr.mxu0 0.0
        %1121 = vmatpush1.msra.mxu0 0.0
        %1122 = vmatprep.subr.mxu0 0.0
        %1123 = vmatpush1.msra.mxu0 0.0
        %1124 = vmatprep.subr.mxu0 0.0
        %1125 = vmatpush1.msra.mxu0 0.0
        %1126 = vmatprep.mubr.f32.mxu0 0.0
        %1127 = vmatmul.mubr.f32.gmra.mrb[0].mxu0 %v1060
        %v1128 = vpop.f32.mrb[0].mxu0
        %v1129 = vadd.f32 0.0, %v1128
        %v1130 = vpop.f32.mrb[0].mxu0
        %1131 = vdwg.mxu0
        %v1133 = vsel %vm700, %v1052, 0
        %1135 = vmatprep.subr.mxu0 0.0
        %1136 = vmatpush1.msra.mxu0 %v1056
        %1137 = vmatprep.subr.mxu0 0.0
        %1138 = vmatpush1.msra.mxu0 0.0
        %1139 = vmatprep.subr.mxu0 0.0
        %1140 = vmatpush1.msra.mxu0 0.0
        %1141 = vmatprep.subr.mxu0 0.0
        %1142 = vmatpush1.msra.mxu0 0.0
        %1143 = vmatprep.subr.mxu0 0.0
        %1144 = vmatpush1.msra.mxu0 0.0
        %1145 = vmatprep.subr.mxu0 0.0
        %1146 = vmatpush1.msra.mxu0 0.0
        %1147 = vmatprep.subr.mxu0 0.0
        %1148 = vmatpush1.msra.mxu0 0.0
        %1149 = vmatprep.subr.mxu0 0.0
        %1150 = vmatpush1.msra.mxu0 0.0
        %1151 = vmatprep.subr.mxu0 0.0
        %1152 = vmatpush1.msra.mxu0 0.0
        %1153 = vmatprep.subr.mxu0 0.0
        %1154 = vmatpush1.msra.mxu0 0.0
        %1155 = vmatprep.subr.mxu0 0.0
        %1156 = vmatpush1.msra.mxu0 0.0
        %1157 = vmatprep.subr.mxu0 0.0
        %1158 = vmatpush1.msra.mxu0 0.0
        %1159 = vmatprep.subr.mxu0 0.0
        %1160 = vmatpush1.msra.mxu0 0.0
        %1161 = vmatprep.subr.mxu0 0.0
        %1162 = vmatpush1.msra.mxu0 0.0
        %1163 = vmatprep.subr.mxu0 0.0
        %1164 = vmatpush1.msra.mxu0 0.0
        %1165 = vmatprep.subr.mxu0 0.0
        %1166 = vmatpush1.msra.mxu0 0.0
        %1167 = vmatprep.subr.mxu0 0.0
        %1168 = vmatpush1.msra.mxu0 0.0
        %1169 = vmatprep.subr.mxu0 0.0
        %1170 = vmatpush1.msra.mxu0 0.0
        %1171 = vmatprep.subr.mxu0 0.0
        %1172 = vmatpush1.msra.mxu0 0.0
        %1173 = vmatprep.subr.mxu0 0.0
        %1174 = vmatpush1.msra.mxu0 0.0
        %1175 = vmatprep.subr.mxu0 0.0
        %1176 = vmatpush1.msra.mxu0 0.0
        %1177 = vmatprep.subr.mxu0 0.0
        %1178 = vmatpush1.msra.mxu0 0.0
        %1179 = vmatprep.subr.mxu0 0.0
        %1180 = vmatpush1.msra.mxu0 0.0
        %1181 = vmatprep.subr.mxu0 0.0
        %1182 = vmatpush1.msra.mxu0 0.0
        %1183 = vmatprep.subr.mxu0 0.0
        %1184 = vmatpush1.msra.mxu0 0.0
        %1185 = vmatprep.subr.mxu0 0.0
        %1186 = vmatpush1.msra.mxu0 0.0
        %1187 = vmatprep.subr.mxu0 0.0
        %1188 = vmatpush1.msra.mxu0 0.0
        %1189 = vmatprep.subr.mxu0 0.0
        %1190 = vmatpush1.msra.mxu0 0.0
        %1191 = vmatprep.subr.mxu0 0.0
        %1192 = vmatpush1.msra.mxu0 0.0
        %1193 = vmatprep.subr.mxu0 0.0
        %1194 = vmatpush1.msra.mxu0 0.0
        %1195 = vmatprep.subr.mxu0 0.0
        %1196 = vmatpush1.msra.mxu0 0.0
        %1197 = vmatprep.subr.mxu0 0.0
        %1198 = vmatpush1.msra.mxu0 0.0
        %1199 = vmatprep.mubr.f32.mxu0 0.0
        %1200 = vmatmul.mubr.f32.gmra.mrb[0].mxu0 %v1133
        %v1201 = vpop.f32.mrb[0].mxu0
        %v1202 = vadd.f32 0.0, %v1201
        %v1203 = vpop.f32.mrb[0].mxu0
        %1204 = vdwg.mxu0
        %v1206 = vsel %vm700, %v1053, 0
        %1208 = vmatprep.subr.mxu0 0.0
        %1209 = vmatpush1.msra.mxu0 %v1057
        %1210 = vmatprep.subr.mxu0 0.0
        %1211 = vmatpush1.msra.mxu0 0.0
        %1212 = vmatprep.subr.mxu0 0.0
        %1213 = vmatpush1.msra.mxu0 0.0
        %1214 = vmatprep.subr.mxu0 0.0
        %1215 = vmatpush1.msra.mxu0 0.0
        %1216 = vmatprep.subr.mxu0 0.0
        %1217 = vmatpush1.msra.mxu0 0.0
        %1218 = vmatprep.subr.mxu0 0.0
        %1219 = vmatpush1.msra.mxu0 0.0
        %1220 = vmatprep.subr.mxu0 0.0
        %1221 = vmatpush1.msra.mxu0 0.0
        %1222 = vmatprep.subr.mxu0 0.0
        %1223 = vmatpush1.msra.mxu0 0.0
        %1224 = vmatprep.subr.mxu0 0.0
        %1225 = vmatpush1.msra.mxu0 0.0
        %1226 = vmatprep.subr.mxu0 0.0
        %1227 = vmatpush1.msra.mxu0 0.0
        %1228 = vmatprep.subr.mxu0 0.0
        %1229 = vmatpush1.msra.mxu0 0.0
        %1230 = vmatprep.subr.mxu0 0.0
        %1231 = vmatpush1.msra.mxu0 0.0
        %1232 = vmatprep.subr.mxu0 0.0
        %1233 = vmatpush1.msra.mxu0 0.0
        %1234 = vmatprep.subr.mxu0 0.0
        %1235 = vmatpush1.msra.mxu0 0.0
        %1236 = vmatprep.subr.mxu0 0.0
        %1237 = vmatpush1.msra.mxu0 0.0
        %1238 = vmatprep.subr.mxu0 0.0
        %1239 = vmatpush1.msra.mxu0 0.0
        %1240 = vmatprep.subr.mxu0 0.0
        %1241 = vmatpush1.msra.mxu0 0.0
        %1242 = vmatprep.subr.mxu0 0.0
        %1243 = vmatpush1.msra.mxu0 0.0
        %1244 = vmatprep.subr.mxu0 0.0
        %1245 = vmatpush1.msra.mxu0 0.0
        %1246 = vmatprep.subr.mxu0 0.0
        %1247 = vmatpush1.msra.mxu0 0.0
        %1248 = vmatprep.subr.mxu0 0.0
        %1249 = vmatpush1.msra.mxu0 0.0
        %1250 = vmatprep.subr.mxu0 0.0
        %1251 = vmatpush1.msra.mxu0 0.0
        %1252 = vmatprep.subr.mxu0 0.0
        %1253 = vmatpush1.msra.mxu0 0.0
        %1254 = vmatprep.subr.mxu0 0.0
        %1255 = vmatpush1.msra.mxu0 0.0
        %1256 = vmatprep.subr.mxu0 0.0
        %1257 = vmatpush1.msra.mxu0 0.0
        %1258 = vmatprep.subr.mxu0 0.0
        %1259 = vmatpush1.msra.mxu0 0.0
        %1260 = vmatprep.subr.mxu0 0.0
        %1261 = vmatpush1.msra.mxu0 0.0
        %1262 = vmatprep.subr.mxu0 0.0
        %1263 = vmatpush1.msra.mxu0 0.0
        %1264 = vmatprep.subr.mxu0 0.0
        %1265 = vmatpush1.msra.mxu0 0.0
        %1266 = vmatprep.subr.mxu0 0.0
        %1267 = vmatpush1.msra.mxu0 0.0
        %1268 = vmatprep.subr.mxu0 0.0
        %1269 = vmatpush1.msra.mxu0 0.0
        %1270 = vmatprep.subr.mxu0 0.0
        %1271 = vmatpush1.msra.mxu0 0.0
        %1272 = vmatprep.mubr.f32.mxu0 0.0
        %1273 = vmatmul.mubr.f32.gmra.mrb[0].mxu0 %v1206
        %v1274 = vpop.f32.mrb[0].mxu0
        %v1275 = vadd.f32 0.0, %v1274
        %v1276 = vpop.f32.mrb[0].mxu0
        %1277 = vdwg.mxu0
        %v1279 = vsel %vm700, %v1054, 0
        %1281 = vmatprep.subr.mxu0 0.0
        %1282 = vmatpush1.msra.mxu0 %v1058
        %1283 = vmatprep.subr.mxu0 0.0
        %1284 = vmatpush1.msra.mxu0 0.0
        %1285 = vmatprep.subr.mxu0 0.0
        %1286 = vmatpush1.msra.mxu0 0.0
        %1287 = vmatprep.subr.mxu0 0.0
        %1288 = vmatpush1.msra.mxu0 0.0
        %1289 = vmatprep.subr.mxu0 0.0
        %1290 = vmatpush1.msra.mxu0 0.0
        %1291 = vmatprep.subr.mxu0 0.0
        %1292 = vmatpush1.msra.mxu0 0.0
        %1293 = vmatprep.subr.mxu0 0.0
        %1294 = vmatpush1.msra.mxu0 0.0
        %1295 = vmatprep.subr.mxu0 0.0
        %1296 = vmatpush1.msra.mxu0 0.0
        %1297 = vmatprep.subr.mxu0 0.0
        %1298 = vmatpush1.msra.mxu0 0.0
        %1299 = vmatprep.subr.mxu0 0.0
        %1300 = vmatpush1.msra.mxu0 0.0
        %1301 = vmatprep.subr.mxu0 0.0
        %1302 = vmatpush1.msra.mxu0 0.0
        %1303 = vmatprep.subr.mxu0 0.0
        %1304 = vmatpush1.msra.mxu0 0.0
        %1305 = vmatprep.subr.mxu0 0.0
        %1306 = vmatpush1.msra.mxu0 0.0
        %1307 = vmatprep.subr.mxu0 0.0
        %1308 = vmatpush1.msra.mxu0 0.0
        %1309 = vmatprep.subr.mxu0 0.0
        %1310 = vmatpush1.msra.mxu0 0.0
        %1311 = vmatprep.subr.mxu0 0.0
        %1312 = vmatpush1.msra.mxu0 0.0
        %1313 = vmatprep.subr.mxu0 0.0
        %1314 = vmatpush1.msra.mxu0 0.0
        %1315 = vmatprep.subr.mxu0 0.0
        %1316 = vmatpush1.msra.mxu0 0.0
        %1317 = vmatprep.subr.mxu0 0.0
        %1318 = vmatpush1.msra.mxu0 0.0
        %1319 = vmatprep.subr.mxu0 0.0
        %1320 = vmatpush1.msra.mxu0 0.0
        %1321 = vmatprep.subr.mxu0 0.0
        %1322 = vmatpush1.msra.mxu0 0.0
        %1323 = vmatprep.subr.mxu0 0.0
        %1324 = vmatpush1.msra.mxu0 0.0
        %1325 = vmatprep.subr.mxu0 0.0
        %1326 = vmatpush1.msra.mxu0 0.0
        %1327 = vmatprep.subr.mxu0 0.0
        %1328 = vmatpush1.msra.mxu0 0.0
        %1329 = vmatprep.subr.mxu0 0.0
        %1330 = vmatpush1.msra.mxu0 0.0
        %1331 = vmatprep.subr.mxu0 0.0
        %1332 = vmatpush1.msra.mxu0 0.0
        %1333 = vmatprep.subr.mxu0 0.0
        %1334 = vmatpush1.msra.mxu0 0.0
        %1335 = vmatprep.subr.mxu0 0.0
        %1336 = vmatpush1.msra.mxu0 0.0
        %1337 = vmatprep.subr.mxu0 0.0
        %1338 = vmatpush1.msra.mxu0 0.0
        %1339 = vmatprep.subr.mxu0 0.0
        %1340 = vmatpush1.msra.mxu0 0.0
        %1341 = vmatprep.subr.mxu0 0.0
        %1342 = vmatpush1.msra.mxu0 0.0
        %1343 = vmatprep.subr.mxu0 0.0
        %1344 = vmatpush1.msra.mxu0 0.0
        %1345 = vmatprep.mubr.f32.mxu0 0.0
        %1346 = vmatmul.mubr.f32.gmra.mrb[0].mxu0 %v1279
        %v1347 = vpop.f32.mrb[0].mxu0
        %v1348 = vadd.f32 0.0, %v1347
        %v1349 = vpop.f32.mrb[0].mxu0
        %1350 = vdwg.mxu0
        %1351 = vst.msk [vmem:[#allocation5] sm:$0xff] %vm700, %v1129
        %1353 = vrot.lane.b32.xlu0 %v1202, 8
        %v1354 = vpop.permute.xlu0 %1353
        %vm1356 = vcmask 130112
        %1357 = vst.msk [vmem:[#allocation5] sm:$0xff] %vm1356, %v1354
        %1359 = vrot.lane.b32.xlu0 %v1275, 16
        %v1360 = vpop.permute.xlu0 %1359
        %vm1362 = vcmask 195712
        %1363 = vst.msk [vmem:[#allocation5] sm:$0xff] %vm1362, %v1360
        %1365 = vrot.lane.b32.xlu0 %v1348, 24
        %v1366 = vpop.permute.xlu0 %1365
        %vm1368 = vcmask 261312
        %1369 = vst.msk [vmem:[#allocation5] sm:$0xff] %vm1368, %v1366
        %v1370 = vld [vmem:[#allocation5] sm:$0xff]
        %v1371 = vld [vmem:[%s6] sm:$0xff]
        %v1372 = vld [vmem:[%s6 + $0x8] sm:$0xff]
        %v1373 = vld [vmem:[%s6 + $0x10] sm:$0xff]
        %v1374 = vld [vmem:[%s6 + $0x18] sm:$0xff]
        %v1375 = vld [vmem:[%s7] sm:$0x1]
        %v1377 = vlaneseq
        %v1378 = vshrl.u32 %v1377, 7
        %v1379 = vsub.s32 0, %v1378
        %v1380 = vrot.slane %v1375, %v1379
        %vm1382 = vcmask 261120
        %v1384 = vsel %vm1382, %v1370, 0
        %1386 = vmatprep.subr.mxu0 0.0
        %1387 = vmatpush1.msra.mxu0 %v1371
        %1388 = vmatprep.subr.mxu0 0.0
        %1389 = vmatpush1.msra.mxu0 %v1372
        %1390 = vmatprep.subr.mxu0 0.0
        %1391 = vmatpush1.msra.mxu0 %v1373
        %1392 = vmatprep.subr.mxu0 0.0
        %1393 = vmatpush1.msra.mxu0 %v1374
        %1394 = vmatprep.subr.mxu0 0.0
        %1395 = vmatpush1.msra.mxu0 0.0
        %1396 = vmatprep.subr.mxu0 0.0
        %1397 = vmatpush1.msra.mxu0 0.0
        %1398 = vmatprep.subr.mxu0 0.0
        %1399 = vmatpush1.msra.mxu0 0.0
        %1400 = vmatprep.subr.mxu0 0.0
        %1401 = vmatpush1.msra.mxu0 0.0
        %1402 = vmatprep.subr.mxu0 0.0
        %1403 = vmatpush1.msra.mxu0 0.0
        %1404 = vmatprep.subr.mxu0 0.0
        %1405 = vmatpush1.msra.mxu0 0.0
        %1406 = vmatprep.subr.mxu0 0.0
        %1407 = vmatpush1.msra.mxu0 0.0
        %1408 = vmatprep.subr.mxu0 0.0
        %1409 = vmatpush1.msra.mxu0 0.0
        %1410 = vmatprep.subr.mxu0 0.0
        %1411 = vmatpush1.msra.mxu0 0.0
        %1412 = vmatprep.subr.mxu0 0.0
        %1413 = vmatpush1.msra.mxu0 0.0
        %1414 = vmatprep.subr.mxu0 0.0
        %1415 = vmatpush1.msra.mxu0 0.0
        %1416 = vmatprep.subr.mxu0 0.0
        %1417 = vmatpush1.msra.mxu0 0.0
        %1418 = vmatprep.subr.mxu0 0.0
        %1419 = vmatpush1.msra.mxu0 0.0
        %1420 = vmatprep.subr.mxu0 0.0
        %1421 = vmatpush1.msra.mxu0 0.0
        %1422 = vmatprep.subr.mxu0 0.0
        %1423 = vmatpush1.msra.mxu0 0.0
        %1424 = vmatprep.subr.mxu0 0.0
        %1425 = vmatpush1.msra.mxu0 0.0
        %1426 = vmatprep.subr.mxu0 0.0
        %1427 = vmatpush1.msra.mxu0 0.0
        %1428 = vmatprep.subr.mxu0 0.0
        %1429 = vmatpush1.msra.mxu0 0.0
        %1430 = vmatprep.subr.mxu0 0.0
        %1431 = vmatpush1.msra.mxu0 0.0
        %1432 = vmatprep.subr.mxu0 0.0
        %1433 = vmatpush1.msra.mxu0 0.0
        %1434 = vmatprep.subr.mxu0 0.0
        %1435 = vmatpush1.msra.mxu0 0.0
        %1436 = vmatprep.subr.mxu0 0.0
        %1437 = vmatpush1.msra.mxu0 0.0
        %1438 = vmatprep.subr.mxu0 0.0
        %1439 = vmatpush1.msra.mxu0 0.0
        %1440 = vmatprep.subr.mxu0 0.0
        %1441 = vmatpush1.msra.mxu0 0.0
        %1442 = vmatprep.subr.mxu0 0.0
        %1443 = vmatpush1.msra.mxu0 0.0
        %1444 = vmatprep.subr.mxu0 0.0
        %1445 = vmatpush1.msra.mxu0 0.0
        %1446 = vmatprep.subr.mxu0 0.0
        %1447 = vmatpush1.msra.mxu0 0.0
        %1448 = vmatprep.subr.mxu0 0.0
        %1449 = vmatpush1.msra.mxu0 0.0
        %1450 = vmatprep.mubr.f32.mxu0 0.0
        %1451 = vmatmul.mubr.f32.gmra.mrb[0].mxu0 %v1384
        %v1452 = vpop.f32.mrb[0].mxu0
        %v1453 = vadd.f32 %v1380, %v1452
        %v1454 = vpop.f32.mrb[0].mxu0
        %1455 = vdwg.mxu0
        %v1456 = vld [vmem:[%s504] sm:$0xff]
        %v1457 = vadd.f32 %v1456, %v1453
        %v1458 = vld [vmem:[%s8] sm:$0x1]
        %v1459 = vld [vmem:[%s9] sm:$0x1]
        %v1460 = vsel %vm1382, %v1457, 0.0
        %1461 = vadd.xlane.f32.xlu0 %v1460
        %v1462 = vpop.xlane.xlu0 %1461
        %v1463 = vrcp.pop 32.0
        %v1464 = vmul.f32 %v1462, %v1463
        %v1465 = vsub.f32 %v1457, %v1464
        %v1466 = vmul.f32 %v1465, %v1465
        %v1467 = vsel %vm1382, %v1466, 0.0
        %1468 = vadd.xlane.f32.xlu0 %v1467
        %v1469 = vpop.xlane.xlu0 %1468
        %v1470 = vmul.f32 %v1469, %v1463
        %v1471 = vadd.f32 %v1470, 1e-05
        %v1472 = vrsqrt.pop %v1471
        %v1473 = vmul.f32 %v1465, %v1472
        %v1475 = vlaneseq
        %v1476 = vshrl.u32 %v1475, 7
        %v1477 = vsub.s32 0, %v1476
        %v1478 = vrot.slane %v1458, %v1477
        %v1480 = vmul.f32 %v1473, %v1478
        %v1482 = vlaneseq
        %v1483 = vshrl.u32 %v1482, 7
        %v1484 = vsub.s32 0, %v1483
        %v1485 = vrot.slane %v1459, %v1484
        %v1487 = vadd.f32 %v1480, %v1485
        %v1488 = vld [vmem:[%s10] sm:$0xff]
        %v1489 = vld [vmem:[%s10 + $0x8] sm:$0xff]
        %v1490 = vld [vmem:[%s10 + $0x10] sm:$0xff]
        %v1491 = vld [vmem:[%s10 + $0x18] sm:$0xff]
        %v1492 = vld [vmem:[%s11] sm:$0x1]
        %v1494 = vlaneseq
        %v1495 = vshrl.u32 %v1494, 7
        %v1496 = vsub.s32 0, %v1495
        %v1497 = vrot.slane %v1492, %v1496
        %v1500 = vsel %vm1382, %v1487, 0
        %1502 = vmatprep.subr.mxu0 0.0
        %1503 = vmatpush1.msra.mxu0 %v1488
        %1504 = vmatprep.subr.mxu0 0.0
        %1505 = vmatpush1.msra.mxu0 %v1489
        %1506 = vmatprep.subr.mxu0 0.0
        %1507 = vmatpush1.msra.mxu0 %v1490
        %1508 = vmatprep.subr.mxu0 0.0
        %1509 = vmatpush1.msra.mxu0 %v1491
        %1510 = vmatprep.subr.mxu0 0.0
        %1511 = vmatpush1.msra.mxu0 0.0
        %1512 = vmatprep.subr.mxu0 0.0
        %1513 = vmatpush1.msra.mxu0 0.0
        %1514 = vmatprep.subr.mxu0 0.0
        %1515 = vmatpush1.msra.mxu0 0.0
        %1516 = vmatprep.subr.mxu0 0.0
        %1517 = vmatpush1.msra.mxu0 0.0
        %1518 = vmatprep.subr.mxu0 0.0
        %1519 = vmatpush1.msra.mxu0 0.0
        %1520 = vmatprep.subr.mxu0 0.0
        %1521 = vmatpush1.msra.mxu0 0.0
        %1522 = vmatprep.subr.mxu0 0.0
        %1523 = vmatpush1.msra.mxu0 0.0
        %1524 = vmatprep.subr.mxu0 0.0
        %1525 = vmatpush1.msra.mxu0 0.0
        %1526 = vmatprep.subr.mxu0 0.0
        %1527 = vmatpush1.msra.mxu0 0.0
        %1528 = vmatprep.subr.mxu0 0.0
        %1529 = vmatpush1.msra.mxu0 0.0
        %1530 = vmatprep.subr.mxu0 0.0
        %1531 = vmatpush1.msra.mxu0 0.0
        %1532 = vmatprep.subr.mxu0 0.0
        %1533 = vmatpush1.msra.mxu0 0.0
        %1534 = vmatprep.subr.mxu0 0.0
        %1535 = vmatpush1.msra.mxu0 0.0
        %1536 = vmatprep.subr.mxu0 0.0
        %1537 = vmatpush1.msra.mxu0 0.0
        %1538 = vmatprep.subr.mxu0 0.0
        %1539 = vmatpush1.msra.mxu0 0.0
        %1540 = vmatprep.subr.mxu0 0.0
        %1541 = vmatpush1.msra.mxu0 0.0
        %1542 = vmatprep.subr.mxu0 0.0
        %1543 = vmatpush1.msra.mxu0 0.0
        %1544 = vmatprep.subr.mxu0 0.0
        %1545 = vmatpush1.msra.mxu0 0.0
        %1546 = vmatprep.subr.mxu0 0.0
        %1547 = vmatpush1.msra.mxu0 0.0
        %1548 = vmatprep.subr.mxu0 0.0
        %1549 = vmatpush1.msra.mxu0 0.0
        %1550 = vmatprep.subr.mxu0 0.0
        %1551 = vmatpush1.msra.mxu0 0.0
        %1552 = vmatprep.subr.mxu0 0.0
        %1553 = vmatpush1.msra.mxu0 0.0
        %1554 = vmatprep.subr.mxu0 0.0
        %1555 = vmatpush1.msra.mxu0 0.0
        %1556 = vmatprep.subr.mxu0 0.0
        %1557 = vmatpush1.msra.mxu0 0.0
        %1558 = vmatprep.subr.mxu0 0.0
        %1559 = vmatpush1.msra.mxu0 0.0
        %1560 = vmatprep.subr.mxu0 0.0
        %1561 = vmatpush1.msra.mxu0 0.0
        %1562 = vmatprep.subr.mxu0 0.0
        %1563 = vmatpush1.msra.mxu0 0.0
        %1564 = vmatprep.subr.mxu0 0.0
        %1565 = vmatpush1.msra.mxu0 0.0
        %1566 = vmatprep.mubr.f32.mxu0 0.0
        %1567 = vmatmul.mubr.f32.gmra.mrb[0].mxu0 %v1500
        %v1568 = vpop.f32.mrb[0].mxu0
        %v1569 = vadd.f32 %v1497, %v1568
        %v1570 = vpop.f32.mrb[0].mxu0
        %1571 = vdwg.mxu0
        %v1572 = vmul.f32 %v1569, 0.5
        %v1573 = vmul.f32 %v1569, 0.70710677
        %v1574 = verf.f32.pop %v1573
        %v1575 = vadd.f32 %v1574, 1.0
        %v1576 = vmul.f32 %v1572, %v1575
        %v1577 = vld [vmem:[%s12] sm:$0xff]
        %v1578 = vld [vmem:[%s12 + $0x8] sm:$0xff]
        %v1579 = vld [vmem:[%s12 + $0x10] sm:$0xff]
        %v1580 = vld [vmem:[%s12 + $0x18] sm:$0xff]
        %v1581 = vld [vmem:[%s12 + $0x20] sm:$0xff]
        %v1582 = vld [vmem:[%s12 + $0x28] sm:$0xff]
        %v1583 = vld [vmem:[%s12 + $0x30] sm:$0xff]
        %v1584 = vld [vmem:[%s12 + $0x38] sm:$0xff]
        %v1585 = vld [vmem:[%s12 + $0x40] sm:$0xff]
        %v1586 = vld [vmem:[%s12 + $0x48] sm:$0xff]
        %v1587 = vld [vmem:[%s12 + $0x50] sm:$0xff]
        %v1588 = vld [vmem:[%s12 + $0x58] sm:$0xff]
        %v1589 = vld [vmem:[%s12 + $0x60] sm:$0xff]
        %v1590 = vld [vmem:[%s12 + $0x68] sm:$0xff]
        %v1591 = vld [vmem:[%s12 + $0x70] sm:$0xff]
        %v1592 = vld [vmem:[%s12 + $0x78] sm:$0xff]
        %v1593 = vld [vmem:[%s13] sm:$0x1]
        %v1595 = vlaneseq
        %v1596 = vshrl.u32 %v1595, 7
        %v1597 = vsub.s32 0, %v1596
        %v1598 = vrot.slane %v1593, %v1597
        %1600 = vmatprep.subr.mxu0 0.0
        %1601 = vmatpush1.msra.mxu0 %v1577
        %1602 = vmatprep.subr.mxu0 0.0
        %1603 = vmatpush1.msra.mxu0 %v1578
        %1604 = vmatprep.subr.mxu0 0.0
        %1605 = vmatpush1.msra.mxu0 %v1579
        %1606 = vmatprep.subr.mxu0 0.0
        %1607 = vmatpush1.msra.mxu0 %v1580
        %1608 = vmatprep.subr.mxu0 0.0
        %1609 = vmatpush1.msra.mxu0 %v1581
        %1610 = vmatprep.subr.mxu0 0.0
        %1611 = vmatpush1.msra.mxu0 %v1582
        %1612 = vmatprep.subr.mxu0 0.0
        %1613 = vmatpush1.msra.mxu0 %v1583
        %1614 = vmatprep.subr.mxu0 0.0
        %1615 = vmatpush1.msra.mxu0 %v1584
        %1616 = vmatprep.subr.mxu0 0.0
        %1617 = vmatpush1.msra.mxu0 %v1585
        %1618 = vmatprep.subr.mxu0 0.0
        %1619 = vmatpush1.msra.mxu0 %v1586
        %1620 = vmatprep.subr.mxu0 0.0
        %1621 = vmatpush1.msra.mxu0 %v1587
        %1622 = vmatprep.subr.mxu0 0.0
        %1623 = vmatpush1.msra.mxu0 %v1588
        %1624 = vmatprep.subr.mxu0 0.0
        %1625 = vmatpush1.msra.mxu0 %v1589
        %1626 = vmatprep.subr.mxu0 0.0
        %1627 = vmatpush1.msra.mxu0 %v1590
        %1628 = vmatprep.subr.mxu0 0.0
        %1629 = vmatpush1.msra.mxu0 %v1591
        %1630 = vmatprep.subr.mxu0 0.0
        %1631 = vmatpush1.msra.mxu0 %v1592
        %1632 = vmatprep.subr.mxu0 0.0
        %1633 = vmatpush1.msra.mxu0 0.0
        %1634 = vmatprep.subr.mxu0 0.0
        %1635 = vmatpush1.msra.mxu0 0.0
        %1636 = vmatprep.subr.mxu0 0.0
        %1637 = vmatpush1.msra.mxu0 0.0
        %1638 = vmatprep.subr.mxu0 0.0
        %1639 = vmatpush1.msra.mxu0 0.0
        %1640 = vmatprep.subr.mxu0 0.0
        %1641 = vmatpush1.msra.mxu0 0.0
        %1642 = vmatprep.subr.mxu0 0.0
        %1643 = vmatpush1.msra.mxu0 0.0
        %1644 = vmatprep.subr.mxu0 0.0
        %1645 = vmatpush1.msra.mxu0 0.0
        %1646 = vmatprep.subr.mxu0 0.0
        %1647 = vmatpush1.msra.mxu0 0.0
        %1648 = vmatprep.subr.mxu0 0.0
        %1649 = vmatpush1.msra.mxu0 0.0
        %1650 = vmatprep.subr.mxu0 0.0
        %1651 = vmatpush1.msra.mxu0 0.0
        %1652 = vmatprep.subr.mxu0 0.0
        %1653 = vmatpush1.msra.mxu0 0.0
        %1654 = vmatprep.subr.mxu0 0.0
        %1655 = vmatpush1.msra.mxu0 0.0
        %1656 = vmatprep.subr.mxu0 0.0
        %1657 = vmatpush1.msra.mxu0 0.0
        %1658 = vmatprep.subr.mxu0 0.0
        %1659 = vmatpush1.msra.mxu0 0.0
        %1660 = vmatprep.subr.mxu0 0.0
        %1661 = vmatpush1.msra.mxu0 0.0
        %1662 = vmatprep.subr.mxu0 0.0
        %1663 = vmatpush1.msra.mxu0 0.0
        %1664 = vmatprep.mubr.f32.mxu0 0.0
        %1665 = vmatmul.mubr.f32.gmra.mrb[0].mxu0 %v1576
        %v1666 = vpop.f32.mrb[0].mxu0
        %v1667 = vadd.f32 %v1598, %v1666
        %v1668 = vpop.f32.mrb[0].mxu0
        %1669 = vdwg.mxu0
        %v1670 = vadd.f32 %v1457, %v1667
        %1671 = vst.msk [vmem:[%s493] sm:$0xff] %vm1382, %v1670
        %s1672 = sand.u32 %s356, 1
        %s1673 = scalar_lea.sflag [#allocation7], %s1672
        %s1674 = sand.u32 %s356, 1
        %s1675 = smul.addr %s1674, 8
        %s1676 = scalar_lea.vmem [#allocation6], %s1675
        // Predicated region
        $region81: #{tpu_custom_call.1} parent=75 // pred_check
          %p1677 = pneg %p366
        $region82: #{tpu_custom_call.1} parent=75 // pred_check_branch
          %1679 = sbr.rel (%p1677) target = $region84
        $region83: #{tpu_custom_call.1} parent=75 // pred_region
          %s1681 = ssub.s32 128, 128
          %1682 = vsyncadd %s1673, %s1681
          %s1683 = sadd.s32 %s33, %s32
          %s1684 = smul.addr %s1683, 128
          %s1685 = scalar_lea.hbm %s14, %s1684
          %s1687 = sshll.u32 %s1676, 4
          %s1688 = int_to_ptr.vmem [resolvable:$true] %s1687
          %1690 = dma.vmem_to_hbm [thread:$0]  %s1688, 128, %s1685, %s1673
        $region84: #{tpu_custom_call.1} parent=75 // pred_fallthru
          _
      $region76: #{tpu_custom_call.1} parent=5 // pred_fallthru
        _
      %p1691 = scmp.le.s32.totalorder 2, %s23
      // Predicated region
      $region85: #{tpu_custom_call.1} parent=5 // pred_check
        %p1692 = pneg %p1691
      $region86: #{tpu_custom_call.1} parent=5 // pred_check_branch
        %1694 = sbr.rel (%p1692) target = $region88
      $region87: #{tpu_custom_call.1} parent=5 // pred_region
        %s1695 = ssub.s32 %s23, 2
        // Predicated region
        $region89: #{tpu_custom_call.1} parent=87 // pred_check
          %p1696 = pneg %p372
        $region90: #{tpu_custom_call.1} parent=87 // pred_check_branch
          %1698 = sbr.rel (%p1696) target = $region92
        $region91: #{tpu_custom_call.1} parent=87 // pred_region
          %s1699 = sand.u32 %s357, 1
          %s1700 = scalar_lea.sflag [#allocation7], %s1699
          %s1701 = sand.u32 %s357, 1
          %s1702 = smul.addr %s1701, 8
          %s1703 = scalar_lea.vmem [#allocation6], %s1702
          %1704 = dma.done %s1700, 128
        $region92: #{tpu_custom_call.1} parent=87 // pred_fallthru
          _
      $region88: #{tpu_custom_call.1} parent=5 // pred_fallthru
        _
    $region6: #{tpu_custom_call.1} parent=1 // loop_footer
      %s27 = sadd.s32 1, %s23
    $region7: #{tpu_custom_call.1} parent=1 // loop_footer_branch
      %22 = sbr.rel target = $region3
    $region8: #{tpu_custom_call.1} parent=1 // loop_exit
      _
    %1705 = vsyncpa [#allocation7], 1
    %s1706 = scalar_lea.sflag [#allocation7], 1
    %1707 = vsyncpa %s1706, 1

</llo_original>
